<compile_context>
chip_gen: v7x
topology: tpu7x:2x2x1
jax: 0.10.0
libtpu: 0.0.40
codegen_flags: <defaults>
</compile_context>

<pallas_src>
import functools
import math

import numpy as np
import jax
import jax.numpy as jnp
from jax.experimental import pallas as pl
from jax.experimental.pallas import tpu as pltpu


# ----------------------------------------------------------------------------
# helpers
# ----------------------------------------------------------------------------
def _round_up(x: int, m: int) -> int:
    return (x + m - 1) // m * m


def _cdiv(a: int, b: int) -> int:
    return -(-a // b)


def conv2d_output_shape(h_w, kernel_size=1, stride=1, padding=0, dilation=1):
    if not isinstance(kernel_size, tuple):
        kernel_size = (int(kernel_size), int(kernel_size))
    h = math.floor((h_w[0] + 2 * padding - dilation * (kernel_size[0] - 1) - 1) / stride + 1)
    w = math.floor((h_w[1] + 2 * padding - dilation * (kernel_size[1] - 1) - 1) / stride + 1)
    return (h, w)


def _apply_act(x, act):
    if act == "leaky_relu":            # nn.LeakyReLU() default slope = 0.01
        return jnp.where(x >= 0.0, x, 0.01 * x)
    if act == "relu":
        return jnp.maximum(x, 0.0)
    if act == "gelu":                  # nn.GELU() default = exact (erf) GELU
        return jax.nn.gelu(x, approximate=False)
    if act == "none":
        return x
    raise ValueError(act)


def _default_vmem_limit():
    # Generation-aware VMEM budget: ~40 MiB on v7x (64 MiB physical VMEM),
    # ~80 MiB on v5e/v6e (128 MiB physical).  Conservative fallback if the
    # query is unavailable.
    try:
        cap = pltpu.get_tpu_info().vmem_capacity_bytes
    except Exception:
        cap = 64 * 1024 * 1024
    return int(min(cap * 5 // 8, 96 * 1024 * 1024))


_VMEM_LIMIT = _default_vmem_limit()


def _pick_row_tile(M: int, tile_m: int) -> int:
    # bf16 sublane packing -> row tiles in multiples of 16.
    tm = min(tile_m, _round_up(max(M, 16), 16))
    # Guarantee >= 2 grid steps for non-trivial work so the "parallel" row axis
    # can shard across both v7x TensorCores (harmless extra step on 1-TC gens).
    if _cdiv(M, tm) == 1 and M >= 128:
        tm = _round_up(_cdiv(M, 2), 16)
    return tm


# ----------------------------------------------------------------------------
# Pallas kernel 1: gridded fused  out = act(A @ W + b)   (conv im2col GEMM)
#   A: bf16 rows streamed, W: bf16 resident, b: f32 resident, f32 MXU accum,
#   bf16 output (next layer re-reads it).
# ----------------------------------------------------------------------------
def _gemm_bias_act_kernel(act, a_ref, w_ref, b_ref, o_ref):
    acc = jnp.dot(a_ref[...].astype(jnp.bfloat16), w_ref[...],
                  preferred_element_type=jnp.float32)
    acc = acc + b_ref[...]                         # (1, Np) broadcasts over rows
    o_ref[...] = _apply_act(acc, act).astype(o_ref.dtype)


def gemm_bias_act(a, w_p, b_p, act, *, tile_m=512, out_dtype=jnp.bfloat16):
    """act(a @ w_p + b_p), gridded over rows of `a` (masked edge blocks).

    a:   (M, K)  bf16/f32
    w_p: (K, Np) bf16  (N pre-padded to a multiple of 128 at init)
    b_p: (1, Np) f32
    returns (M, Np) out_dtype
    """
    M, K = a.shape
    K2, Np = w_p.shape
    assert K == K2 and b_p.shape == (1, Np)

    tm = _pick_row_tile(M, tile_m)
    grid = (_cdiv(M, tm),)

    a_bytes = jnp.dtype(a.dtype).itemsize
    o_bytes = jnp.dtype(out_dtype).itemsize
    cost = pl.CostEstimate(
        flops=2 * M * K * Np,
        transcendentals=M * Np if act == "gelu" else 0,
        bytes_accessed=M * K * a_bytes + K * Np * 2 + Np * 4 + M * Np * o_bytes)

    # TODO(synk): on v5e, sweep pipeline_mode=pl.Buffered(3) on the A-row spec.
    return pl.pallas_call(
        functools.partial(_gemm_bias_act_kernel, act),
        out_shape=jax.ShapeDtypeStruct((M, Np), out_dtype),
        grid=grid,
        in_specs=[
            pl.BlockSpec((tm, K), lambda i: (i, 0)),     # row tile, streamed
            pl.BlockSpec((K, Np), lambda i: (0, 0)),     # weight, resident
            pl.BlockSpec((1, Np), lambda i: (0, 0)),     # bias, resident
        ],
        out_specs=pl.BlockSpec((tm, Np), lambda i: (i, 0)),
        compiler_params=pltpu.CompilerParams(
            dimension_semantics=("parallel",),
            vmem_limit_bytes=_VMEM_LIMIT),
        cost_estimate=cost,
    )(a, w_p, b_p)


# ----------------------------------------------------------------------------
# Pallas kernel 2: dense (LinearLayers) stack fused per row tile
#   Input streamed over rows, all layer weights resident in VMEM.
# ----------------------------------------------------------------------------
def _dense_stack_kernel(acts, x_ref, *refs):
    o_ref = refs[-1]
    h = x_ref[...]
    for li, act in enumerate(acts):
        w = refs[2 * li][...]                        # bf16, resident
        b = refs[2 * li + 1][...]                    # f32 (1, Np)
        h = jnp.dot(h.astype(jnp.bfloat16), w, preferred_element_type=jnp.float32)
        h = _apply_act(h + b, act)
    o_ref[...] = h.astype(o_ref.dtype)


def dense_stack(x, layers, *, tile_m=512):
    """Apply a list of (w_p bf16, b_p f32, act) layers fused in one pallas_call.

    x: (M, K0) bf16/f32 -> (M, Np_last) f32 (padded cols of padded layers stay 0).
    Rows are streamed (tile_m), every layer's weights stay resident in VMEM.
    """
    M, K0 = x.shape
    Np_last = layers[-1][0].shape[1]
    tm = _pick_row_tile(M, tile_m)
    grid = (_cdiv(M, tm),)

    in_specs = [pl.BlockSpec((tm, K0), lambda i: (i, 0))]
    args = [x]
    acts = []
    flops = 0
    bytes_accessed = M * K0 * jnp.dtype(x.dtype).itemsize + M * Np_last * 4
    for w_p, b_p, act in layers:
        in_specs.append(pl.BlockSpec(w_p.shape, lambda i: (0, 0)))
        in_specs.append(pl.BlockSpec(b_p.shape, lambda i: (0, 0)))
        args += [w_p, b_p]
        acts.append(act)
        flops += 2 * M * w_p.shape[0] * w_p.shape[1]
        bytes_accessed += w_p.shape[0] * w_p.shape[1] * 2 + b_p.shape[1] * 4

    return pl.pallas_call(
        functools.partial(_dense_stack_kernel, tuple(acts)),
        out_shape=jax.ShapeDtypeStruct((M, Np_last), jnp.float32),
        grid=grid,
        in_specs=in_specs,
        out_specs=pl.BlockSpec((tm, Np_last), lambda i: (i, 0)),
        compiler_params=pltpu.CompilerParams(
            dimension_semantics=("parallel",),
            vmem_limit_bytes=_VMEM_LIMIT),
        cost_estimate=pl.CostEstimate(flops=flops, transcendentals=0,
                                      bytes_accessed=bytes_accessed),
    )(*args)


# ----------------------------------------------------------------------------
# Conv2d (VALID, square kernel/stride) via transpose-free NHWC im2col + GEMM
# ----------------------------------------------------------------------------
def _im2col_nhwc(x, kh, kw, sh, sw):
    # x: (B, H, W, C) NHWC -> (B*OH*OW, kh*kw*C), columns ordered (kh, kw, c).
    # Strided slices + channel concat only: no activation transposes; done in
    # bf16 so the HBM round trip of the patch matrix is half-width.
    B, H, W, C = x.shape
    OH = (H - kh) // sh + 1
    OW = (W - kw) // sw + 1
    taps = []
    for i in range(kh):
        for j in range(kw):
            taps.append(x[:, i:i + sh * OH:sh, j:j + sw * OW:sw, :])   # (B,OH,OW,C)
    p = jnp.concatenate(taps, axis=-1)                                 # (B,OH,OW,kh*kw*C)
    return p.reshape(B * OH * OW, kh * kw * C), OH, OW


def conv2d_pallas_nhwc(x_nhwc, w_p, b_p, kh, kw, stride, act, oc):
    patches, OH, OW = _im2col_nhwc(x_nhwc, kh, kw, stride, stride)
    y = gemm_bias_act(patches, w_p, b_p, act)          # (B*OH*OW, Np) bf16
    B = x_nhwc.shape[0]
    return y[:, :oc].reshape(B, OH, OW, oc)             # stay NHWC, bf16


# ----------------------------------------------------------------------------
# deterministic parameter init (PyTorch-style uniform bounds)
# ----------------------------------------------------------------------------
def _init_conv(key, oc, ic, kh, kw):
    bound = 1.0 / math.sqrt(ic * kh * kw)
    k1, k2 = jax.random.split(key)
    w = jax.random.uniform(k1, (oc, ic, kh, kw), jnp.float32, -bound, bound)
    b = jax.random.uniform(k2, (oc,), jnp.float32, -bound, bound)
    return w, b


def _init_linear(key, in_f, out_f):
    bound = 1.0 / math.sqrt(in_f)
    k1, k2 = jax.random.split(key)
    w = jax.random.uniform(k1, (in_f, out_f), jnp.float32, -bound, bound)
    b = jax.random.uniform(k2, (out_f,), jnp.float32, -bound, bound)
    return w, b


# ----------------------------------------------------------------------------
# kernel-side parameter packing
# ----------------------------------------------------------------------------
def _pack_conv_weight(wt, bs):
    # OIHW -> (kh, kw, ic) row order, N padded to a multiple of 128, bf16.
    oc, ic, kh, kw = wt.shape
    K = kh * kw * ic
    np_ = _round_up(max(oc, 128), 128)
    w_mat = jnp.transpose(wt, (2, 3, 1, 0)).reshape(K, oc)
    w_p = jnp.zeros((K, np_), jnp.float32).at[:, :oc].set(w_mat).astype(jnp.bfloat16)
    b_p = jnp.zeros((1, np_), jnp.float32).at[0, :oc].set(bs)
    return w_p, b_p, np_


def _pack_dense_weight(w, b, k_rows, input_perm=None):
    in_f, out_f = w.shape
    assert in_f <= k_rows
    np_ = _round_up(max(out_f, 128), 128)
    w_k = w if input_perm is None else w[jnp.asarray(input_perm)]
    w_p = jnp.zeros((k_rows, np_), jnp.float32).at[:in_f, :out_f].set(w_k)
    w_p = w_p.astype(jnp.bfloat16)
    b_p = jnp.zeros((1, np_), jnp.float32).at[0, :out_f].set(b)
    return w_p, b_p, np_


# ----------------------------------------------------------------------------
# LinearLayers / ConvLayers equivalents
# ----------------------------------------------------------------------------
class LinearLayersPallas:
    """Mirror of LinearLayers: dense_depth x (Linear + ReLU), optional head Linear."""

    def __init__(self, input_size, dense_n=64, dense_depth=0, output_size=None, *, key):
        self.layers = []          # canonical (w, b, act) -- reference semantics
        self.input_size = input_size
        self.output_size = input_size
        for i in range(dense_depth):
            in_f = input_size if i == 0 else dense_n
            key, sub = jax.random.split(key)
            w, b = _init_linear(sub, in_f, dense_n)
            self.layers.append((w, b, "relu"))
            self.output_size = dense_n
        if output_size:
            key, sub = jax.random.split(key)
            w, b = _init_linear(sub, self.output_size, output_size)
            self.layers.append((w, b, "none"))
            self.output_size = output_size
        self.kernel_layers = self.build_kernel_layers()

    def build_kernel_layers(self, k_rows0=None, input_perm=None):
        """Padded/bf16 kernel-ready layer chain.  `k_rows0` is the (possibly
        padded) width of the incoming activation; `input_perm` permutes the
        rows of the first weight (to absorb flatten-order differences)."""
        kls = []
        prev = k_rows0 if k_rows0 is not None else self.input_size
        for idx, (w, b, act) in enumerate(self.layers):
            perm = input_perm if idx == 0 else None
            w_p, b_p, np_ = _pack_dense_weight(w, b, prev, perm)
            kls.append((w_p, b_p, act))
            prev = np_
        return kls

    def __call__(self, x):
        if not self.layers:
            return x
        batch = x.shape[:-1]
        h = x.reshape(-1, x.shape[-1])
        h = dense_stack(h, self.kernel_layers)[:, :self.output_size]
        return h.reshape(*batch, self.output_size)


class ConvLayersPallas:
    """Mirror of ConvLayers.forward for the predefined conv presets."""

    _PRESETS = {
        # (out_channels, kernel, stride, activation)
        "nature": [(32, 8, 4, "leaky_relu"), (64, 4, 2, "leaky_relu"), (64, 3, 1, "leaky_relu")],
        "simple": [(16, 8, 4, "gelu"), (32, 4, 2, "gelu")],
        "small":  [(35, 3, 1, "leaky_relu"), (144, 3, 1, "leaky_relu")],
    }

    def __init__(self, in_height, in_width, in_channels, conv,
                 out_dense_n=64, out_dense_depth=0, output_size=None, *, key):
        if conv not in self._PRESETS:
            raise RuntimeError(f"No pre-defined {conv} convolutional layer")
        specs = self._PRESETS[conv]

        h, w_, c = in_height, in_width, in_channels
        self.conv_params = []     # canonical (weight OIHW, bias, stride, act)
        conv_geoms = []           # (in_h, in_w, in_c, oh, ow, oc, k, s, act)
        for oc, k, s, act in specs:
            key, sub = jax.random.split(key)
            wt, bs = _init_conv(sub, oc, c, k, k)
            self.conv_params.append((wt, bs, s, act))
            oh, ow = conv2d_output_shape((h, w_), k, s)
            conv_geoms.append((h, w_, c, oh, ow, oc, k, s, act))
            h, w_, c = oh, ow, oc
        assert h > 0 and w_ > 0, "input spatial size too small for this preset"
        self.conv_output_size = h * w_ * c

        key, sub = jax.random.split(key)
        self.dense = LinearLayersPallas(self.conv_output_size, out_dense_n,
                                        out_dense_depth, output_size, key=sub)
        self.output_size = self.dense.output_size

        # ---- kernel-side execution plan ----------------------------------
        # Fold the last conv into the dense stack when its kernel covers its
        # whole input (output spatial 1x1): its im2col is then a pure NHWC
        # flatten, so it becomes a plain GEMM — one fewer pallas_call and one
        # fewer HBM round trip for the tiny trailing layer.
        in_h_last, in_w_last, _, oh_l, ow_l, _, k_l, _, _ = conv_geoms[-1]
        self._fold_last_conv = (oh_l == 1 and ow_l == 1 and
                                k_l == in_h_last and k_l == in_w_last)
        n_pallas_convs = len(specs) - (1 if self._fold_last_conv else 0)

        self.conv_kernel_params = []   # (w_p bf16 (K,Np), b_p (1,Np), kh, kw, s, act, oc)
        for li in range(n_pallas_convs):
            wt, bs, s, act = self.conv_params[li]
            w_p, b_p, _ = _pack_conv_weight(wt, bs)
            k = wt.shape[2]
            self.conv_kernel_params.append((w_p, b_p, k, k, s, act, wt.shape[0]))

        dense_kernel_layers = []
        if self._fold_last_conv:
            wt, bs, s, act = self.conv_params[-1]
            w_p, b_p, np_ = _pack_conv_weight(wt, bs)
            dense_kernel_layers.append((w_p, b_p, act))
            # 1x1 spatial => NHWC flatten == NCHW flatten; no permutation needed
            # for the first real dense layer; chain the padded width np_.
            dense_kernel_layers += self.dense.build_kernel_layers(k_rows0=np_,
                                                                  input_perm=None)
        elif self.dense.layers:
            # permutation mapping NHWC flatten order (oh,ow,c) to the PyTorch
            # NCHW flatten order (c,oh,ow) — folded into the first dense weight.
            perm = np.arange(c * h * w_).reshape(c, h, w_).transpose(1, 2, 0).reshape(-1)
            dense_kernel_layers += self.dense.build_kernel_layers(
                k_rows0=self.conv_output_size, input_perm=perm)
        self.dense_kernel_layers = dense_kernel_layers

    def __call__(self, x):
        assert x.ndim >= 4, "The dimension of input should be greater than or equal to 4"
        batch = x.shape[:-3]
        h = x.reshape((-1,) + x.shape[-3:])                       # (Bflat, C, H, W)
        # Single NCHW->NHWC transpose at the interface; bf16 activations from
        # here on (the MXU operands were bf16 anyway).
        h = jnp.transpose(h, (0, 2, 3, 1)).astype(jnp.bfloat16)   # NHWC
        for (w_p, b_p, kh, kw, s, act, oc) in self.conv_kernel_params:
            h = conv2d_pallas_nhwc(h, w_p, b_p, kh, kw, s, act, oc)
        if self.dense_kernel_layers:
            hflat = h.reshape(h.shape[0], -1)        # NHWC flatten; order absorbed in weights
            out = dense_stack(hflat, self.dense_kernel_layers)[:, :self.output_size]
        else:
            # no dense layers and no fold: expose the PyTorch NCHW flatten order
            out = jnp.transpose(h, (0, 3, 1, 2)).reshape(h.shape[0], -1).astype(jnp.float32)
        return out.reshape(*batch, self.output_size)


# ----------------------------------------------------------------------------
# pure-JAX reference (XLA conv / dot, canonical PyTorch layouts) for checking
# ----------------------------------------------------------------------------
def reference_forward(model: ConvLayersPallas, x):
    batch = x.shape[:-3]
    h = x.reshape((-1,) + x.shape[-3:])
    for wt, bs, s, act in model.conv_params:
        h = jax.lax.conv_general_dilated(
            h, wt, (s, s), "VALID",
            dimension_numbers=("NCHW", "OIHW", "NCHW"),
            precision=jax.lax.Precision.HIGHEST)
        h = _apply_act(h + bs[None, :, None, None], act)
    h = h.reshape(h.shape[0], -1)                     # NCHW flatten (c, oh, ow)
    for w, b, act in model.dense.layers:
        h = _apply_act(jnp.dot(h, w, precision=jax.lax.Precision.HIGHEST) + b, act)
    return h.reshape(*batch, model.output_size)


# ----------------------------------------------------------------------------
if __name__ == "__main__":
    key = jax.random.PRNGKey(0)
    k_param, k_x = jax.random.split(key)

    # nature preset: 36x36x4 -> conv1 (8,8,32) -> conv2 (3,3,64) -> conv3 (1,1,64)
    # conv3 output is 1x1, so it is folded into the fused dense stack:
    # dense kernel = [conv3-as-GEMM, Linear(64,64)+ReLU, Linear(64,32)].
    model = ConvLayersPallas(in_height=36, in_width=36, in_channels=4, conv="nature",
                             out_dense_n=64, out_dense_depth=1, output_size=32,
                             key=k_param)

    x = jax.random.normal(k_x, (2, 4, 36, 36), jnp.float32)   # NCHW, batch=2

    fwd = jax.jit(lambda inp: model(inp))
    out = jax.block_until_ready(fwd(x))

    assert out.shape == (2, 32), out.shape
    ref = reference_forward(model, x)
    np.testing.assert_allclose(np.asarray(out), np.asarray(ref), rtol=2e-2, atol=2e-2)

    print("KERNEL_OK")
</pallas_src>

<mosaic_0001>
module attributes {stable_mosaic.version = 11 : i64} {
  func.func @_gemm_bias_act_kernel(%arg0: i32, %arg1: memref<64x256xbf16, #tpu.memory_space<vmem>>, %arg2: memref<256x128xbf16, #tpu.memory_space<vmem>>, %arg3: memref<1x128xf32, #tpu.memory_space<vmem>>, %arg4: memref<64x128xbf16, #tpu.memory_space<vmem>>) attributes {dimension_semantics = [#tpu.dimension_semantics<parallel>], iteration_bounds = array<i64: 2>, scalar_prefetch = 0 : i64, scratch_operands = 0 : i64, tpu.core_type = #tpu.core_type<tc>, window_params = [{transform_indices = @transform_0, window_bounds = array<i64: 64, 256>}, {pipeline_mode = #tpu.pipeline_mode<synchronous>, transform_indices = @transform_1, window_bounds = array<i64: 256, 128>}, {pipeline_mode = #tpu.pipeline_mode<synchronous>, transform_indices = @transform_2, window_bounds = array<i64: 1, 128>}, {transform_indices = @transform_3, window_bounds = array<i64: 64, 128>}]} {
    %c0 = arith.constant 0 : index
    %c0_0 = arith.constant 0 : index
    %0 = vector.load %arg1[%c0, %c0_0] : memref<64x256xbf16, #tpu.memory_space<vmem>>, vector<64x256xbf16>
    %c0_1 = arith.constant 0 : index
    %c0_2 = arith.constant 0 : index
    %1 = vector.load %arg2[%c0_1, %c0_2] : memref<256x128xbf16, #tpu.memory_space<vmem>>, vector<256x128xbf16>
    %cst = arith.constant dense<0.000000e+00> : vector<64x128xf32>
    %2 = tpu.matmul %0, %1, %cst {dimension_numbers = #tpu.dot_dimension_numbers<[1], [0], [0], [1], [0, 0, 1, 1], [], []>} : vector<64x256xbf16>, vector<256x128xbf16>, vector<64x128xf32> -> vector<64x128xf32>
    %c0_3 = arith.constant 0 : index
    %c0_4 = arith.constant 0 : index
    %3 = vector.load %arg3[%c0_3, %c0_4] : memref<1x128xf32, #tpu.memory_space<vmem>>, vector<1x128xf32>
    %4 = vector.broadcast %3 : vector<1x128xf32> to vector<64x128xf32>
    %5 = arith.addf %2, %4 : vector<64x128xf32>
    %cst_5 = arith.constant 0.000000e+00 : f32
    %6 = vector.broadcast %cst_5 : f32 to vector<64x128xf32>
    %7 = arith.cmpf oge, %5, %6 : vector<64x128xf32>
    %cst_6 = arith.constant 0.00999999977 : f32
    %8 = vector.broadcast %cst_6 : f32 to vector<64x128xf32>
    %9 = arith.mulf %8, %5 : vector<64x128xf32>
    %10 = arith.select %7, %5, %9 : vector<64x128xi1>, vector<64x128xf32>
    %11 = arith.truncf %10 : vector<64x128xf32> to vector<64x128xbf16>
    %c0_7 = arith.constant 0 : index
    %c0_8 = arith.constant 0 : index
    %12 = vector.load %arg4[%c0_7, %c0_8] : memref<64x128xbf16, #tpu.memory_space<vmem>>, vector<64x128xbf16>
    tpu.vector_store %arg4[%c0_7, %c0_8], %11 {strides = array<i32>} : memref<64x128xbf16, #tpu.memory_space<vmem>>, vector<64x128xbf16>,
    return
  }
  func.func @transform_0(%arg0: i32) -> (i32, i32) {
    %c0_i32 = arith.constant 0 : i32
    %c0_i32_0 = arith.constant 0 : i32
    return %arg0, %c0_i32 : i32, i32
  }
  func.func @transform_1(%arg0: i32) -> (i32, i32) {
    %c0_i32 = arith.constant 0 : i32
    %c0_i32_0 = arith.constant 0 : i32
    %c0_i32_1 = arith.constant 0 : i32
    return %c0_i32, %c0_i32_0 : i32, i32
  }
  func.func @transform_2(%arg0: i32) -> (i32, i32) {
    %c0_i32 = arith.constant 0 : i32
    %c0_i32_0 = arith.constant 0 : i32
    %c0_i32_1 = arith.constant 0 : i32
    return %c0_i32, %c0_i32_0 : i32, i32
  }
  func.func @transform_3(%arg0: i32) -> (i32, i32) {
    %c0_i32 = arith.constant 0 : i32
    %c0_i32_0 = arith.constant 0 : i32
    return %arg0, %c0_i32 : i32, i32
  }
}

module attributes {stable_mosaic.version = 11 : i64} {
  func.func @_gemm_bias_act_kernel(%arg0: i32, %arg1: memref<32x512xbf16, #tpu.memory_space<vmem>>, %arg2: memref<512x128xbf16, #tpu.memory_space<vmem>>, %arg3: memref<1x128xf32, #tpu.memory_space<vmem>>, %arg4: memref<32x128xbf16, #tpu.memory_space<vmem>>) attributes {dimension_semantics = [#tpu.dimension_semantics<parallel>], iteration_bounds = array<i64: 1>, scalar_prefetch = 0 : i64, scratch_operands = 0 : i64, tpu.core_type = #tpu.core_type<tc>, window_params = [{transform_indices = @transform_0, window_bounds = array<i64: 32, 512>}, {pipeline_mode = #tpu.pipeline_mode<synchronous>, transform_indices = @transform_1, window_bounds = array<i64: 512, 128>}, {pipeline_mode = #tpu.pipeline_mode<synchronous>, transform_indices = @transform_2, window_bounds = array<i64: 1, 128>}, {transform_indices = @transform_3, window_bounds = array<i64: 32, 128>}]} {
    %c0 = arith.constant 0 : index
    %c0_0 = arith.constant 0 : index
    %0 = vector.load %arg1[%c0, %c0_0] : memref<32x512xbf16, #tpu.memory_space<vmem>>, vector<32x512xbf16>
    %c0_1 = arith.constant 0 : index
    %c0_2 = arith.constant 0 : index
    %1 = vector.load %arg2[%c0_1, %c0_2] : memref<512x128xbf16, #tpu.memory_space<vmem>>, vector<512x128xbf16>
    %cst = arith.constant dense<0.000000e+00> : vector<32x128xf32>
    %2 = tpu.matmul %0, %1, %cst {dimension_numbers = #tpu.dot_dimension_numbers<[1], [0], [0], [1], [0, 0, 1, 1], [], []>} : vector<32x512xbf16>, vector<512x128xbf16>, vector<32x128xf32> -> vector<32x128xf32>
    %c0_3 = arith.constant 0 : index
    %c0_4 = arith.constant 0 : index
    %3 = vector.load %arg3[%c0_3, %c0_4] : memref<1x128xf32, #tpu.memory_space<vmem>>, vector<1x128xf32>
    %4 = vector.broadcast %3 : vector<1x128xf32> to vector<32x128xf32>
    %5 = arith.addf %2, %4 : vector<32x128xf32>
    %cst_5 = arith.constant 0.000000e+00 : f32
    %6 = vector.broadcast %cst_5 : f32 to vector<32x128xf32>
    %7 = arith.cmpf oge, %5, %6 : vector<32x128xf32>
    %cst_6 = arith.constant 0.00999999977 : f32
    %8 = vector.broadcast %cst_6 : f32 to vector<32x128xf32>
    %9 = arith.mulf %8, %5 : vector<32x128xf32>
    %10 = arith.select %7, %5, %9 : vector<32x128xi1>, vector<32x128xf32>
    %11 = arith.truncf %10 : vector<32x128xf32> to vector<32x128xbf16>
    %c0_7 = arith.constant 0 : index
    %c0_8 = arith.constant 0 : index
    %12 = vector.load %arg4[%c0_7, %c0_8] : memref<32x128xbf16, #tpu.memory_space<vmem>>, vector<32x128xbf16>
    tpu.vector_store %arg4[%c0_7, %c0_8], %11 {strides = array<i32>} : memref<32x128xbf16, #tpu.memory_space<vmem>>, vector<32x128xbf16>,
    return
  }
  func.func @transform_0(%arg0: i32) -> (i32, i32) {
    %c0_i32 = arith.constant 0 : i32
    %c0_i32_0 = arith.constant 0 : i32
    return %arg0, %c0_i32 : i32, i32
  }
  func.func @transform_1(%arg0: i32) -> (i32, i32) {
    %c0_i32 = arith.constant 0 : i32
    %c0_i32_0 = arith.constant 0 : i32
    %c0_i32_1 = arith.constant 0 : i32
    return %c0_i32, %c0_i32_0 : i32, i32
  }
  func.func @transform_2(%arg0: i32) -> (i32, i32) {
    %c0_i32 = arith.constant 0 : i32
    %c0_i32_0 = arith.constant 0 : i32
    %c0_i32_1 = arith.constant 0 : i32
    return %c0_i32, %c0_i32_0 : i32, i32
  }
  func.func @transform_3(%arg0: i32) -> (i32, i32) {
    %c0_i32 = arith.constant 0 : i32
    %c0_i32_0 = arith.constant 0 : i32
    return %arg0, %c0_i32 : i32, i32
  }
}

module attributes {stable_mosaic.version = 11 : i64} {
  func.func @_dense_stack_kernel(%arg0: i32, %arg1: memref<16x576xbf16, #tpu.memory_space<vmem>>, %arg2: memref<576x128xbf16, #tpu.memory_space<vmem>>, %arg3: memref<1x128xf32, #tpu.memory_space<vmem>>, %arg4: memref<128x128xbf16, #tpu.memory_space<vmem>>, %arg5: memref<1x128xf32, #tpu.memory_space<vmem>>, %arg6: memref<128x128xbf16, #tpu.memory_space<vmem>>, %arg7: memref<1x128xf32, #tpu.memory_space<vmem>>, %arg8: memref<16x128xf32, #tpu.memory_space<vmem>>) attributes {dimension_semantics = [#tpu.dimension_semantics<parallel>], iteration_bounds = array<i64: 1>, scalar_prefetch = 0 : i64, scratch_operands = 0 : i64, tpu.core_type = #tpu.core_type<tc>, window_params = [{transform_indices = @transform_0, window_bounds = array<i64: 16, 576>}, {pipeline_mode = #tpu.pipeline_mode<synchronous>, transform_indices = @transform_1, window_bounds = array<i64: 576, 128>}, {pipeline_mode = #tpu.pipeline_mode<synchronous>, transform_indices = @transform_2, window_bounds = array<i64: 1, 128>}, {pipeline_mode = #tpu.pipeline_mode<synchronous>, transform_indices = @transform_3, window_bounds = array<i64: 128, 128>}, {pipeline_mode = #tpu.pipeline_mode<synchronous>, transform_indices = @transform_4, window_bounds = array<i64: 1, 128>}, {pipeline_mode = #tpu.pipeline_mode<synchronous>, transform_indices = @transform_5, window_bounds = array<i64: 128, 128>}, {pipeline_mode = #tpu.pipeline_mode<synchronous>, transform_indices = @transform_6, window_bounds = array<i64: 1, 128>}, {transform_indices = @transform_7, window_bounds = array<i64: 16, 128>}]} {
    %c0 = arith.constant 0 : index
    %c0_0 = arith.constant 0 : index
    %0 = vector.load %arg1[%c0, %c0_0] : memref<16x576xbf16, #tpu.memory_space<vmem>>, vector<16x576xbf16>
    %c0_1 = arith.constant 0 : index
    %c0_2 = arith.constant 0 : index
    %1 = vector.load %arg2[%c0_1, %c0_2] : memref<576x128xbf16, #tpu.memory_space<vmem>>, vector<576x128xbf16>
    %c0_3 = arith.constant 0 : index
    %c0_4 = arith.constant 0 : index
    %2 = vector.load %arg3[%c0_3, %c0_4] : memref<1x128xf32, #tpu.memory_space<vmem>>, vector<1x128xf32>
    %cst = arith.constant dense<0.000000e+00> : vector<16x128xf32>
    %3 = tpu.matmul %0, %1, %cst {dimension_numbers = #tpu.dot_dimension_numbers<[1], [0], [0], [1], [0, 0, 1, 1], [], []>} : vector<16x576xbf16>, vector<576x128xbf16>, vector<16x128xf32> -> vector<16x128xf32>
    %4 = vector.broadcast %2 : vector<1x128xf32> to vector<16x128xf32>
    %5 = arith.addf %3, %4 : vector<16x128xf32>
    %cst_5 = arith.constant 0.000000e+00 : f32
    %6 = vector.broadcast %cst_5 : f32 to vector<16x128xf32>
    %7 = arith.cmpf oge, %5, %6 : vector<16x128xf32>
    %cst_6 = arith.constant 0.00999999977 : f32
    %8 = vector.broadcast %cst_6 : f32 to vector<16x128xf32>
    %9 = arith.mulf %8, %5 : vector<16x128xf32>
    %10 = arith.select %7, %5, %9 : vector<16x128xi1>, vector<16x128xf32>
    %c0_7 = arith.constant 0 : index
    %c0_8 = arith.constant 0 : index
    %11 = vector.load %arg4[%c0_7, %c0_8] : memref<128x128xbf16, #tpu.memory_space<vmem>>, vector<128x128xbf16>
    %c0_9 = arith.constant 0 : index
    %c0_10 = arith.constant 0 : index
    %12 = vector.load %arg5[%c0_9, %c0_10] : memref<1x128xf32, #tpu.memory_space<vmem>>, vector<1x128xf32>
    %13 = arith.truncf %10 : vector<16x128xf32> to vector<16x128xbf16>
    %cst_11 = arith.constant dense<0.000000e+00> : vector<16x128xf32>
    %14 = tpu.matmul %13, %11, %cst_11 {dimension_numbers = #tpu.dot_dimension_numbers<[1], [0], [0], [1], [0, 0, 1, 1], [], []>} : vector<16x128xbf16>, vector<128x128xbf16>, vector<16x128xf32> -> vector<16x128xf32>
    %15 = vector.broadcast %12 : vector<1x128xf32> to vector<16x128xf32>
    %16 = arith.addf %14, %15 : vector<16x128xf32>
    %cst_12 = arith.constant 0.000000e+00 : f32
    %17 = vector.broadcast %cst_12 : f32 to vector<16x128xf32>
    %18 = arith.maximumf %16, %17 : vector<16x128xf32>
    %c0_13 = arith.constant 0 : index
    %c0_14 = arith.constant 0 : index
    %19 = vector.load %arg6[%c0_13, %c0_14] : memref<128x128xbf16, #tpu.memory_space<vmem>>, vector<128x128xbf16>
    %c0_15 = arith.constant 0 : index
    %c0_16 = arith.constant 0 : index
    %20 = vector.load %arg7[%c0_15, %c0_16] : memref<1x128xf32, #tpu.memory_space<vmem>>, vector<1x128xf32>
    %21 = arith.truncf %18 : vector<16x128xf32> to vector<16x128xbf16>
    %cst_17 = arith.constant dense<0.000000e+00> : vector<16x128xf32>
    %22 = tpu.matmul %21, %19, %cst_17 {dimension_numbers = #tpu.dot_dimension_numbers<[1], [0], [0], [1], [0, 0, 1, 1], [], []>} : vector<16x128xbf16>, vector<128x128xbf16>, vector<16x128xf32> -> vector<16x128xf32>
    %23 = vector.broadcast %20 : vector<1x128xf32> to vector<16x128xf32>
    %24 = arith.addf %22, %23 : vector<16x128xf32>
    %c0_18 = arith.constant 0 : index
    %c0_19 = arith.constant 0 : index
    %25 = vector.load %arg8[%c0_18, %c0_19] : memref<16x128xf32, #tpu.memory_space<vmem>>, vector<16x128xf32>
    tpu.vector_store %arg8[%c0_18, %c0_19], %24 {strides = array<i32>} : memref<16x128xf32, #tpu.memory_space<vmem>>, vector<16x128xf32>,
    return
  }
  func.func @transform_0(%arg0: i32) -> (i32, i32) {
    %c0_i32 = arith.constant 0 : i32
    %c0_i32_0 = arith.constant 0 : i32
    return %arg0, %c0_i32 : i32, i32
  }
  func.func @transform_1(%arg0: i32) -> (i32, i32) {
    %c0_i32 = arith.constant 0 : i32
    %c0_i32_0 = arith.constant 0 : i32
    %c0_i32_1 = arith.constant 0 : i32
    return %c0_i32, %c0_i32_0 : i32, i32
  }
  func.func @transform_2(%arg0: i32) -> (i32, i32) {
    %c0_i32 = arith.constant 0 : i32
    %c0_i32_0 = arith.constant 0 : i32
    %c0_i32_1 = arith.constant 0 : i32
    return %c0_i32, %c0_i32_0 : i32, i32
  }
  func.func @transform_3(%arg0: i32) -> (i32, i32) {
    %c0_i32 = arith.constant 0 : i32
    %c0_i32_0 = arith.constant 0 : i32
    %c0_i32_1 = arith.constant 0 : i32
    return %c0_i32, %c0_i32_0 : i32, i32
  }
  func.func @transform_4(%arg0: i32) -> (i32, i32) {
    %c0_i32 = arith.constant 0 : i32
    %c0_i32_0 = arith.constant 0 : i32
    %c0_i32_1 = arith.constant 0 : i32
    return %c0_i32, %c0_i32_0 : i32, i32
  }
  func.func @transform_5(%arg0: i32) -> (i32, i32) {
    %c0_i32 = arith.constant 0 : i32
    %c0_i32_0 = arith.constant 0 : i32
    %c0_i32_1 = arith.constant 0 : i32
    return %c0_i32, %c0_i32_0 : i32, i32
  }
  func.func @transform_6(%arg0: i32) -> (i32, i32) {
    %c0_i32 = arith.constant 0 : i32
    %c0_i32_0 = arith.constant 0 : i32
    %c0_i32_1 = arith.constant 0 : i32
    return %c0_i32, %c0_i32_0 : i32, i32
  }
  func.func @transform_7(%arg0: i32) -> (i32, i32) {
    %c0_i32 = arith.constant 0 : i32
    %c0_i32_0 = arith.constant 0 : i32
    return %arg0, %c0_i32 : i32, i32
  }
}

</mosaic_0001>

<llo_original>
// kernel: _lambda_.3
$region0: #{_lambda_.3}
  #allocation0 [shape = 'u32[]', space=smem, size = 0x4, offset = 0x4, fixed_abs, tag = 'smem constant byte address 0x4 - core index']
  #allocation1 [shape = 'u32[144,128]{1,0:T(1,128)}', space=vmem, size = 0x12000, scoped, tag = 'internal scratch']
  %s0 = inlined_call_operand.vmem [shape: bf16[128,256], index: 0, kind: input, shape index: {}]
  %s1 = inlined_call_operand.vmem [shape: bf16[256,128], index: 1, kind: input, shape index: {}]
  %s2 = inlined_call_operand.vmem [shape: f32[1,128], index: 2, kind: input, shape index: {}]
  %s3 = inlined_call_operand.vmem [shape: bf16[128,128], index: 3, kind: output, shape index: {}]
  %s4 = sld [smem:[#allocation0]]
  $region45: #{_lambda_.3} parent=0
    _
  %s6 = ssub.s32 1, %s4
  %s7 = scalar_select 0, %s6, %s4
  loop: start=0, step=1, limit=4
  $region2: #{_lambda_.3} parent=0 // loop_pre_header
    _
  $region3: #{_lambda_.3} parent=0 // loop_header
    %s9 = sphi 0, %s13
    %p10 = scmp.ge.s32.totalorder %s9, 4
    %s19 = sphi 0, %s21
    %s22 = sphi 0, %s19
    %s23 = sphi 0, %s22
    %s39 = sphi 0, %s23
    %s43 = sphi 0, %s43
    %s45 = sphi 0, %s43
    %s46 = sphi 0, %s45
    %s60 = sphi 0, %s46
    %s64 = sphi 0, %s64
    %s66 = sphi 0, %s64
    %s67 = sphi 0, %s66
    %s81 = sphi 0, %s67
    %s87 = sphi 0, %s89
    %s90 = sphi 0, %s87
    %s91 = sphi 0, %s90
    %s107 = sphi 0, %s91
  $region4: #{_lambda_.3} parent=0 // loop_header_branch
    %12 = sbr.rel (%p10) target = $region8
  $region5: #{_lambda_.3} parent=0 // loop_body
    %s14 = ssub.s32 %s9, 1
    %s15 = ssub.s32 %s9, 2
    %s16 = sadd.s32 %s9, 1
    %s17 = ssub.s32 %s9, %s16
    %p18 = scmp.eq.s32.totalorder %s17, 0
    %s20 = sadd.s32 %s19, 1
    %s21 = scalar_select %p18, %s19, %s20
    %p24 = pneg %p18
    %p25 = scmp.eq.s32.totalorder %s9, 1
    %p26 = por %p24, %p25
    %p27 = scmp.ne.s32.totalorder %s19, %s22
    %p28 = scmp.eq.s32.totalorder %s9, 0
    %p29 = por %p27, %p28
    %p30 = scmp.ne.s32.totalorder %s19, %s22
    %p31 = scmp.eq.s32.totalorder %s14, 1
    %p32 = por %p30, %p31
    %p33 = scmp.ne.s32.totalorder %s22, %s23
    %p34 = scmp.eq.s32.totalorder %s14, 0
    %p35 = por %p33, %p34
    %p36 = scmp.ne.s32.totalorder %s22, %s23
    %p37 = scmp.eq.s32.totalorder %s15, 1
    %p38 = por %p36, %p37
    %p40 = scmp.ne.s32.totalorder %s23, %s39
    %p41 = scmp.eq.s32.totalorder %s15, 0
    %p42 = por %p40, %p41
    %s44 = sadd.s32 %s43, 1
    %p47 = scmp.eq.s32.totalorder %s9, 1
    %p48 = scmp.ne.s32.totalorder %s43, %s45
    %p49 = scmp.eq.s32.totalorder %s9, 0
    %p50 = por %p48, %p49
    %p51 = scmp.ne.s32.totalorder %s43, %s45
    %p52 = scmp.eq.s32.totalorder %s14, 1
    %p53 = por %p51, %p52
    %p54 = scmp.ne.s32.totalorder %s45, %s46
    %p55 = scmp.eq.s32.totalorder %s14, 0
    %p56 = por %p54, %p55
    %p57 = scmp.ne.s32.totalorder %s45, %s46
    %p58 = scmp.eq.s32.totalorder %s15, 1
    %p59 = por %p57, %p58
    %p61 = scmp.ne.s32.totalorder %s46, %s60
    %p62 = scmp.eq.s32.totalorder %s15, 0
    %p63 = por %p61, %p62
    %s65 = sadd.s32 %s64, 1
    %p68 = scmp.eq.s32.totalorder %s9, 1
    %p69 = scmp.ne.s32.totalorder %s64, %s66
    %p70 = scmp.eq.s32.totalorder %s9, 0
    %p71 = por %p69, %p70
    %p72 = scmp.ne.s32.totalorder %s64, %s66
    %p73 = scmp.eq.s32.totalorder %s14, 1
    %p74 = por %p72, %p73
    %p75 = scmp.ne.s32.totalorder %s66, %s67
    %p76 = scmp.eq.s32.totalorder %s14, 0
    %p77 = por %p75, %p76
    %p78 = scmp.ne.s32.totalorder %s66, %s67
    %p79 = scmp.eq.s32.totalorder %s15, 1
    %p80 = por %p78, %p79
    %p82 = scmp.ne.s32.totalorder %s67, %s81
    %p83 = scmp.eq.s32.totalorder %s15, 0
    %p84 = por %p82, %p83
    %s85 = ssub.s32 %s9, %s16
    %p86 = scmp.eq.s32.totalorder %s85, 0
    %s88 = sadd.s32 %s87, 1
    %s89 = scalar_select %p86, %s87, %s88
    %p92 = pneg %p86
    %p93 = scmp.eq.s32.totalorder %s9, 1
    %p94 = por %p92, %p93
    %p95 = scmp.ne.s32.totalorder %s87, %s90
    %p96 = scmp.eq.s32.totalorder %s9, 0
    %p97 = por %p95, %p96
    %p98 = scmp.ne.s32.totalorder %s87, %s90
    %p99 = scmp.eq.s32.totalorder %s14, 1
    %p100 = por %p98, %p99
    %p101 = scmp.ne.s32.totalorder %s90, %s91
    %p102 = scmp.eq.s32.totalorder %s14, 0
    %p103 = por %p101, %p102
    %p104 = scmp.ne.s32.totalorder %s90, %s91
    %p105 = scmp.eq.s32.totalorder %s15, 1
    %p106 = por %p104, %p105
    %p108 = scmp.ne.s32.totalorder %s91, %s107
    %p109 = scmp.eq.s32.totalorder %s15, 0
    %p110 = por %p108, %p109
    %p111 = scmp.le.s32.totalorder 1, %s9
    %p112 = scmp.lt.s32.totalorder %s9, 3
    %p113 = pnand %p111, %p112
    %p114 = pneg %p113
    // Predicated region
    $region9: #{_lambda_.3} parent=5 // pred_check
      _
    $region10: #{_lambda_.3} parent=5 // pred_check_branch
      %116 = sbr.rel (%p113) target = $region12
    $region11: #{_lambda_.3} parent=5 // pred_region
      %s117 = ssub.s32 %s9, 1
      // Predicated region
      $region13: #{_lambda_.3} parent=11 // pred_check
        %p118 = pneg %p56
      $region14: #{_lambda_.3} parent=11 // pred_check_branch
        %120 = sbr.rel (%p118) target = $region16
      $region15: #{_lambda_.3} parent=11 // pred_region
        _
      $region16: #{_lambda_.3} parent=11 // pred_fallthru
        _
      // Predicated region
      $region17: #{_lambda_.3} parent=11 // pred_check
        %p121 = pneg %p77
      $region18: #{_lambda_.3} parent=11 // pred_check_branch
        %123 = sbr.rel (%p121) target = $region20
      $region19: #{_lambda_.3} parent=11 // pred_region
        _
      $region20: #{_lambda_.3} parent=11 // pred_fallthru
        _
    $region12: #{_lambda_.3} parent=5 // pred_fallthru
      _
    %p124 = scmp.lt.s32.totalorder %s9, 2
    // Predicated region
    $region21: #{_lambda_.3} parent=5 // pred_check
      %p125 = pneg %p124
    $region22: #{_lambda_.3} parent=5 // pred_check_branch
      %127 = sbr.rel (%p125) target = $region24
    $region23: #{_lambda_.3} parent=5 // pred_region
      // Predicated region
      $region25: #{_lambda_.3} parent=23 // pred_check
        %p128 = pneg %p29
      $region26: #{_lambda_.3} parent=23 // pred_check_branch
        %130 = sbr.rel (%p128) target = $region28
      $region27: #{_lambda_.3} parent=23 // pred_region
        %s131 = smul.u32 8, %s9
        %p132 = scmp.lt.s32.totalorder %s131, 15
        %s133 = scalar_select %p132, %s131, 15
        %s134 = smul.addr %s133, 2
        %s135 = smul.addr %s134, 4
        %s136 = scalar_lea.vmem %s0, %s135
        %s137 = smul.u32 8, %s9
      $region28: #{_lambda_.3} parent=23 // pred_fallthru
        _
    $region24: #{_lambda_.3} parent=5 // pred_fallthru
      _
    %p138 = scmp.le.s32.totalorder 1, %s9
    %p139 = scmp.lt.s32.totalorder %s9, 3
    %p140 = pnand %p138, %p139
    %p141 = pneg %p140
    // Predicated region
    $region29: #{_lambda_.3} parent=5 // pred_check
      _
    $region30: #{_lambda_.3} parent=5 // pred_check_branch
      %143 = sbr.rel (%p140) target = $region32
    $region31: #{_lambda_.3} parent=5 // pred_region
      %s144 = ssub.s32 %s9, 1
      %s145 = smul.u32 8, %s14
      %p146 = scmp.lt.s32.totalorder %s145, 15
      %s147 = scalar_select %p146, %s145, 15
      %s148 = smul.addr %s147, 2
      %s149 = smul.addr %s148, 4
      %s150 = scalar_lea.vmem %s0, %s149
      %p151 = pneg %p35
      %p152 = pneg %p32
      %p153 = pneg %p56
      %p154 = pneg %p53
      %p155 = pneg %p77
      %p156 = pneg %p74
      %p157 = pneg %p103
      %p158 = pneg %p100
      %s159 = smul.u32 8, %s14
      %p160 = scmp.lt.s32.totalorder %s159, 15
      %s161 = scalar_select %p160, %s159, 15
      %s162 = smul.addr %s161, 4
      %s163 = scalar_lea.vmem %s3, %s162
      %s164 = smul.u32 8, %s14
      %p165 = scmp.lt.s32.totalorder %s164, 15
      %s166 = scalar_select %p165, %s164, 15
      %s167 = smul.addr %s166, 2
      %s168 = smul.addr %s167, 4
      %s169 = scalar_lea.vmem %s0, %s168
      %s170 = smul.u32 8, %s14
      %s171 = smul.u32 8, %s14
      %p172 = scmp.lt.s32.totalorder %s171, 15
      %s173 = scalar_select %p172, %s171, 15
      %s174 = smul.addr %s173, 4
      %s175 = scalar_lea.vmem %s3, %s174
      %s176 = smul.u32 8, %s14
      %v178 = vld [vmem:[%s169] sm:$0xff]
      %v179 = vld [vmem:[%s169 + $0x8] sm:$0xff]
      %v180 = vld [vmem:[%s169 + $0x10] sm:$0xff]
      %v181 = vld [vmem:[%s169 + $0x18] sm:$0xff]
      %v182 = vld [vmem:[%s169 + $0x20] sm:$0xff]
      %v183 = vld [vmem:[%s169 + $0x28] sm:$0xff]
      %v184 = vld [vmem:[%s169 + $0x30] sm:$0xff]
      %v185 = vld [vmem:[%s169 + $0x38] sm:$0xff]
      %v186 = vld [vmem:[%s1] sm:$0xf]
      %v187 = vld [vmem:[%s1 + $0x4] sm:$0xf]
      %v188 = vld [vmem:[%s1 + $0x8] sm:$0xf]
      %v189 = vld [vmem:[%s1 + $0xc] sm:$0xf]
      %v190 = vld [vmem:[%s1 + $0x10] sm:$0xf]
      %v191 = vld [vmem:[%s1 + $0x14] sm:$0xf]
      %v192 = vld [vmem:[%s1 + $0x18] sm:$0xf]
      %v193 = vld [vmem:[%s1 + $0x1c] sm:$0xf]
      %v194 = vld [vmem:[%s1 + $0x20] sm:$0xf]
      %v195 = vld [vmem:[%s1 + $0x24] sm:$0xf]
      %v196 = vld [vmem:[%s1 + $0x28] sm:$0xf]
      %v197 = vld [vmem:[%s1 + $0x2c] sm:$0xf]
      %v198 = vld [vmem:[%s1 + $0x30] sm:$0xf]
      %v199 = vld [vmem:[%s1 + $0x34] sm:$0xf]
      %v200 = vld [vmem:[%s1 + $0x38] sm:$0xf]
      %v201 = vld [vmem:[%s1 + $0x3c] sm:$0xf]
      %v202 = vld [vmem:[%s1 + $0x40] sm:$0xf]
      %v203 = vld [vmem:[%s1 + $0x44] sm:$0xf]
      %v204 = vld [vmem:[%s1 + $0x48] sm:$0xf]
      %v205 = vld [vmem:[%s1 + $0x4c] sm:$0xf]
      %v206 = vld [vmem:[%s1 + $0x50] sm:$0xf]
      %v207 = vld [vmem:[%s1 + $0x54] sm:$0xf]
      %v208 = vld [vmem:[%s1 + $0x58] sm:$0xf]
      %v209 = vld [vmem:[%s1 + $0x5c] sm:$0xf]
      %v210 = vld [vmem:[%s1 + $0x60] sm:$0xf]
      %v211 = vld [vmem:[%s1 + $0x64] sm:$0xf]
      %v212 = vld [vmem:[%s1 + $0x68] sm:$0xf]
      %v213 = vld [vmem:[%s1 + $0x6c] sm:$0xf]
      %v214 = vld [vmem:[%s1 + $0x70] sm:$0xf]
      %v215 = vld [vmem:[%s1 + $0x74] sm:$0xf]
      %v216 = vld [vmem:[%s1 + $0x78] sm:$0xf]
      %v217 = vld [vmem:[%s1 + $0x7c] sm:$0xf]
      %v218 = vld [vmem:[%s2] sm:$0x1]
      %v220 = vlaneseq
      %v221 = vshrl.u32 %v220, 7
      %v222 = vsub.s32 0, %v221
      %v223 = vrot.slane %v218, %v222
      %v233 = vunpack.c.l.b16 %v178
      %v234 = vunpack.c.h.b16 %v178
      %v235 = vunpack.c.l.b16 %v179
      %v236 = vunpack.c.h.b16 %v179
      %v237 = vunpack.c.l.b16 %v180
      %v238 = vunpack.c.h.b16 %v180
      %v239 = vunpack.c.l.b16 %v181
      %v240 = vunpack.c.h.b16 %v181
      %v241 = vunpack.c.l.b16 %v182
      %v242 = vunpack.c.h.b16 %v182
      %v243 = vunpack.c.l.b16 %v183
      %v244 = vunpack.c.h.b16 %v183
      %v245 = vunpack.c.l.b16 %v184
      %v246 = vunpack.c.h.b16 %v184
      %v247 = vunpack.c.l.b16 %v185
      %v248 = vunpack.c.h.b16 %v185
      %v249 = vpack.c.b16 %v235, %v233
      %v250 = vpack.c.b16 %v236, %v234
      %v251 = vpack.c.b16 %v239, %v237
      %v252 = vpack.c.b16 %v240, %v238
      %v253 = vpack.c.b16 %v243, %v241
      %v254 = vpack.c.b16 %v244, %v242
      %v255 = vpack.c.b16 %v247, %v245
      %v256 = vpack.c.b16 %v248, %v246
      %v297 = vunpack.c.l.b16 %v186
      %v298 = vunpack.c.l.b16 %v187
      %v299 = vunpack.c.l.b16 %v188
      %v300 = vunpack.c.l.b16 %v189
      %v301 = vunpack.c.l.b16 %v190
      %v302 = vunpack.c.l.b16 %v191
      %v303 = vunpack.c.l.b16 %v192
      %v304 = vunpack.c.l.b16 %v193
      %v305 = vunpack.c.l.b16 %v194
      %v306 = vunpack.c.l.b16 %v195
      %v307 = vunpack.c.l.b16 %v196
      %v308 = vunpack.c.l.b16 %v197
      %v309 = vunpack.c.l.b16 %v198
      %v310 = vunpack.c.l.b16 %v199
      %v311 = vunpack.c.l.b16 %v200
      %v312 = vunpack.c.l.b16 %v201
      %v313 = vunpack.c.l.b16 %v202
      %v314 = vunpack.c.l.b16 %v203
      %v315 = vunpack.c.l.b16 %v204
      %v316 = vunpack.c.l.b16 %v205
      %v317 = vunpack.c.l.b16 %v206
      %v318 = vunpack.c.l.b16 %v207
      %v319 = vunpack.c.l.b16 %v208
      %v320 = vunpack.c.l.b16 %v209
      %v321 = vunpack.c.l.b16 %v210
      %v322 = vunpack.c.l.b16 %v211
      %v323 = vunpack.c.l.b16 %v212
      %v324 = vunpack.c.l.b16 %v213
      %v325 = vunpack.c.l.b16 %v214
      %v326 = vunpack.c.l.b16 %v215
      %v327 = vunpack.c.l.b16 %v216
      %v328 = vunpack.c.l.b16 %v217
      %v329 = vpack.c.b16 %v298, %v297
      %v330 = vpack.c.b16 %v300, %v299
      %v331 = vpack.c.b16 %v302, %v301
      %v332 = vpack.c.b16 %v304, %v303
      %v333 = vpack.c.b16 %v306, %v305
      %v334 = vpack.c.b16 %v308, %v307
      %v335 = vpack.c.b16 %v310, %v309
      %v336 = vpack.c.b16 %v312, %v311
      %v337 = vpack.c.b16 %v314, %v313
      %v338 = vpack.c.b16 %v316, %v315
      %v339 = vpack.c.b16 %v318, %v317
      %v340 = vpack.c.b16 %v320, %v319
      %v341 = vpack.c.b16 %v322, %v321
      %v342 = vpack.c.b16 %v324, %v323
      %v343 = vpack.c.b16 %v326, %v325
      %v344 = vpack.c.b16 %v328, %v327
      %361 = vmatprep.subr.bf16.mxu0 0
      %362 = vmatpush1.bf16.msra.mxu0 %v329
      %363 = vmatprep.subr.bf16.mxu0 0
      %364 = vmatpush1.bf16.msra.mxu0 %v330
      %365 = vmatprep.subr.bf16.mxu0 0
      %366 = vmatpush1.bf16.msra.mxu0 %v331
      %367 = vmatprep.subr.bf16.mxu0 0
      %368 = vmatpush1.bf16.msra.mxu0 %v332
      %369 = vmatprep.subr.bf16.mxu0 0
      %370 = vmatpush1.bf16.msra.mxu0 %v333
      %371 = vmatprep.subr.bf16.mxu0 0
      %372 = vmatpush1.bf16.msra.mxu0 %v334
      %373 = vmatprep.subr.bf16.mxu0 0
      %374 = vmatpush1.bf16.msra.mxu0 %v335
      %375 = vmatprep.subr.bf16.mxu0 0
      %376 = vmatpush1.bf16.msra.mxu0 %v336
      %377 = vmatprep.subr.bf16.mxu0 0
      %378 = vmatpush1.bf16.msra.mxu0 %v337
      %379 = vmatprep.subr.bf16.mxu0 0
      %380 = vmatpush1.bf16.msra.mxu0 %v338
      %381 = vmatprep.subr.bf16.mxu0 0
      %382 = vmatpush1.bf16.msra.mxu0 %v339
      %383 = vmatprep.subr.bf16.mxu0 0
      %384 = vmatpush1.bf16.msra.mxu0 %v340
      %385 = vmatprep.subr.bf16.mxu0 0
      %386 = vmatpush1.bf16.msra.mxu0 %v341
      %387 = vmatprep.subr.bf16.mxu0 0
      %388 = vmatpush1.bf16.msra.mxu0 %v342
      %389 = vmatprep.subr.bf16.mxu0 0
      %390 = vmatpush1.bf16.msra.mxu0 %v343
      %391 = vmatprep.subr.bf16.mxu0 0
      %392 = vmatpush1.bf16.msra.mxu0 %v344
      %393 = vmatprep.mubr.bf16.mxu0 %v250
      %394 = vmatmul.mubr.bf16.gmra.mrb[0].mxu0 %v249
      %v395 = vpop.f32.mrb[0].mxu0
      %v396 = vadd.f32 %v223, %v395
      %v397 = vpop.f32.mrb[0].mxu0
      %v398 = vpop.f32.mrb[0].mxu0
      %v399 = vadd.f32 %v223, %v398
      %v400 = vpop.f32.mrb[0].mxu0
      %401 = vmatprep.mubr.bf16.mxu0 %v252
      %402 = vmatmul.mubr.bf16.gmra.mrb[0].mxu0 %v251
      %v403 = vpop.f32.mrb[0].mxu0
      %v404 = vadd.f32 %v223, %v403
      %v405 = vpop.f32.mrb[0].mxu0
      %v406 = vpop.f32.mrb[0].mxu0
      %v407 = vadd.f32 %v223, %v406
      %v408 = vpop.f32.mrb[0].mxu0
      %409 = vmatprep.mubr.bf16.mxu0 %v254
      %410 = vmatmul.mubr.bf16.gmra.mrb[0].mxu0 %v253
      %v411 = vpop.f32.mrb[0].mxu0
      %v412 = vadd.f32 %v223, %v411
      %v413 = vpop.f32.mrb[0].mxu0
      %v414 = vpop.f32.mrb[0].mxu0
      %v415 = vadd.f32 %v223, %v414
      %v416 = vpop.f32.mrb[0].mxu0
      %417 = vmatprep.mubr.bf16.mxu0 %v256
      %418 = vmatmul.mubr.bf16.gmra.mrb[0].mxu0 %v255
      %v419 = vpop.f32.mrb[0].mxu0
      %v420 = vadd.f32 %v223, %v419
      %v421 = vpop.f32.mrb[0].mxu0
      %v422 = vpop.f32.mrb[0].mxu0
      %v423 = vadd.f32 %v223, %v422
      %v424 = vpop.f32.mrb[0].mxu0
      %425 = vdwg.mxu0
      %vm426 = vcmp.ge.f32.partialorder %v396, 0.0
      %vm427 = vcmp.ge.f32.partialorder %v399, 0.0
      %vm428 = vcmp.ge.f32.partialorder %v404, 0.0
      %vm429 = vcmp.ge.f32.partialorder %v407, 0.0
      %vm430 = vcmp.ge.f32.partialorder %v412, 0.0
      %vm431 = vcmp.ge.f32.partialorder %v415, 0.0
      %vm432 = vcmp.ge.f32.partialorder %v420, 0.0
      %vm433 = vcmp.ge.f32.partialorder %v423, 0.0
      %v434 = vmul.f32 %v396, 0.01
      %v435 = vmul.f32 %v399, 0.01
      %v436 = vmul.f32 %v404, 0.01
      %v437 = vmul.f32 %v407, 0.01
      %v438 = vmul.f32 %v412, 0.01
      %v439 = vmul.f32 %v415, 0.01
      %v440 = vmul.f32 %v420, 0.01
      %v441 = vmul.f32 %v423, 0.01
      %v442 = vsel %vm426, %v396, %v434
      %v443 = vsel %vm427, %v399, %v435
      %v444 = vsel %vm428, %v404, %v436
      %v445 = vsel %vm429, %v407, %v437
      %v446 = vsel %vm430, %v412, %v438
      %v447 = vsel %vm431, %v415, %v439
      %v448 = vsel %vm432, %v420, %v440
      %v449 = vsel %vm433, %v423, %v441
      %v450 = vpack.c.bf16 %v443, %v442
      %v451 = vpack.c.bf16 %v445, %v444
      %v452 = vpack.c.bf16 %v447, %v446
      %v453 = vpack.c.bf16 %v449, %v448
      %v458 = vunpack.c.l.b16 %v450
      %v459 = vunpack.c.h.b16 %v450
      %v460 = vunpack.c.l.b16 %v451
      %v461 = vunpack.c.h.b16 %v451
      %v462 = vunpack.c.l.b16 %v452
      %v463 = vunpack.c.h.b16 %v452
      %v464 = vunpack.c.l.b16 %v453
      %v465 = vunpack.c.h.b16 %v453
      %v466 = vpack.c.b16 %v458, %v458
      %v467 = vpack.c.b16 %v459, %v459
      %v468 = vpack.c.b16 %v460, %v460
      %v469 = vpack.c.b16 %v461, %v461
      %v470 = vpack.c.b16 %v462, %v462
      %v471 = vpack.c.b16 %v463, %v463
      %v472 = vpack.c.b16 %v464, %v464
      %v473 = vpack.c.b16 %v465, %v465
      %482 = vst [vmem:[%s175] sm:$0xf] %v466
      %483 = vst [vmem:[%s175 + $0x4] sm:$0xf] %v467
      %484 = vst [vmem:[%s175 + $0x8] sm:$0xf] %v468
      %485 = vst [vmem:[%s175 + $0xc] sm:$0xf] %v469
      %486 = vst [vmem:[%s175 + $0x10] sm:$0xf] %v470
      %487 = vst [vmem:[%s175 + $0x14] sm:$0xf] %v471
      %488 = vst [vmem:[%s175 + $0x18] sm:$0xf] %v472
      %489 = vst [vmem:[%s175 + $0x1c] sm:$0xf] %v473
      %s490 = smul.u32 8, %s14
      %p491 = scmp.lt.s32.totalorder %s490, 15
      %s492 = scalar_select %p491, %s490, 15
      %s493 = smul.addr %s492, 4
      %s494 = scalar_lea.vmem %s3, %s493
      // Predicated region
      $region33: #{_lambda_.3} parent=31 // pred_check
        %p495 = pneg %p100
      $region34: #{_lambda_.3} parent=31 // pred_check_branch
        %497 = sbr.rel (%p495) target = $region36
      $region35: #{_lambda_.3} parent=31 // pred_region
        %s498 = smul.u32 8, %s14
      $region36: #{_lambda_.3} parent=31 // pred_fallthru
        _
    $region32: #{_lambda_.3} parent=5 // pred_fallthru
      _
    %p499 = scmp.le.s32.totalorder 2, %s9
    // Predicated region
    $region37: #{_lambda_.3} parent=5 // pred_check
      %p500 = pneg %p499
    $region38: #{_lambda_.3} parent=5 // pred_check_branch
      %502 = sbr.rel (%p500) target = $region40
    $region39: #{_lambda_.3} parent=5 // pred_region
      %s503 = ssub.s32 %s9, 2
      // Predicated region
      $region41: #{_lambda_.3} parent=39 // pred_check
        %p504 = pneg %p106
      $region42: #{_lambda_.3} parent=39 // pred_check_branch
        %506 = sbr.rel (%p504) target = $region44
      $region43: #{_lambda_.3} parent=39 // pred_region
        %s507 = smul.u32 8, %s15
        %p508 = scmp.lt.s32.totalorder %s507, 15
        %s509 = scalar_select %p508, %s507, 15
        %s510 = smul.addr %s509, 4
        %s511 = scalar_lea.vmem %s3, %s510
      $region44: #{_lambda_.3} parent=39 // pred_fallthru
        _
    $region40: #{_lambda_.3} parent=5 // pred_fallthru
      _
  $region6: #{_lambda_.3} parent=0 // loop_footer
    %s13 = sadd.s32 1, %s9
  $region7: #{_lambda_.3} parent=0 // loop_footer_branch
    %8 = sbr.rel target = $region3
  $region8: #{_lambda_.3} parent=0 // loop_exit
    _

// kernel: _lambda_.4
$region0: #{_lambda_.4}
  #allocation0 [shape = 'u32[]', space=smem, size = 0x4, offset = 0x4, fixed_abs, tag = 'smem constant byte address 0x4 - core index']
  #allocation1 [shape = 'u32[144,128]{1,0:T(1,128)}', space=vmem, size = 0x12000, scoped, tag = 'internal scratch']
  %s0 = inlined_call_operand.vmem [shape: bf16[18,512], index: 0, kind: input, shape index: {}]
  %s1 = inlined_call_operand.vmem [shape: bf16[512,128], index: 1, kind: input, shape index: {}]
  %s2 = inlined_call_operand.vmem [shape: f32[1,128], index: 2, kind: input, shape index: {}]
  %s3 = inlined_call_operand.vmem [shape: bf16[18,128], index: 3, kind: output, shape index: {}]
  %s4 = sld [smem:[#allocation0]]
  $region59: #{_lambda_.4} parent=0
    _
  %s6 = ssub.s32 1, %s4
  %s7 = scalar_select 0, %s6, %s4
  $region1: #{_lambda_.4} parent=0
    #allocation2 [shape = 'u8[8192]{0}', space=vmem, size = 0x2000, scoped, tag = 'output window, operand 0, single buffered']
    // Predicated region
    $region2: #{_lambda_.4} parent=1 // pred_check
      _
    $region3: #{_lambda_.4} parent=1 // pred_check_branch
      %9 = sbr.rel (0) target = $region5
    $region4: #{_lambda_.4} parent=1 // pred_region
      _
    $region5: #{_lambda_.4} parent=1 // pred_fallthru
      _
    // Predicated region
    $region6: #{_lambda_.4} parent=1 // pred_check
      _
    $region7: #{_lambda_.4} parent=1 // pred_check_branch
      %11 = sbr.rel (0) target = $region9
    $region8: #{_lambda_.4} parent=1 // pred_region
      _
    $region9: #{_lambda_.4} parent=1 // pred_fallthru
      _
    // Predicated region
    $region10: #{_lambda_.4} parent=1 // pred_check
      _
    $region11: #{_lambda_.4} parent=1 // pred_check_branch
      %13 = sbr.rel (0) target = $region13
    $region12: #{_lambda_.4} parent=1 // pred_region
      _
    $region13: #{_lambda_.4} parent=1 // pred_fallthru
      _
    %v15 = vld [vmem:[%s0] sm:$0xff]
    %v16 = vld [vmem:[%s0 + $0x8] sm:$0xff]
    %v17 = vld [vmem:[%s0 + $0x10] sm:$0xff]
    %v18 = vld [vmem:[%s0 + $0x18] sm:$0xff]
    %v19 = vld [vmem:[%s0 + $0x20] sm:$0xff]
    %v20 = vld [vmem:[%s0 + $0x28] sm:$0xff]
    %v21 = vld [vmem:[%s0 + $0x30] sm:$0xff]
    %v22 = vld [vmem:[%s0 + $0x38] sm:$0xff]
    %v23 = vld [vmem:[%s1] sm:$0xf]
    %v24 = vld [vmem:[%s1 + $0x4] sm:$0xf]
    %v25 = vld [vmem:[%s1 + $0x8] sm:$0xf]
    %v26 = vld [vmem:[%s1 + $0xc] sm:$0xf]
    %v27 = vld [vmem:[%s1 + $0x10] sm:$0xf]
    %v28 = vld [vmem:[%s1 + $0x14] sm:$0xf]
    %v29 = vld [vmem:[%s1 + $0x18] sm:$0xf]
    %v30 = vld [vmem:[%s1 + $0x1c] sm:$0xf]
    %v31 = vld [vmem:[%s1 + $0x20] sm:$0xf]
    %v32 = vld [vmem:[%s1 + $0x24] sm:$0xf]
    %v33 = vld [vmem:[%s1 + $0x28] sm:$0xf]
    %v34 = vld [vmem:[%s1 + $0x2c] sm:$0xf]
    %v35 = vld [vmem:[%s1 + $0x30] sm:$0xf]
    %v36 = vld [vmem:[%s1 + $0x34] sm:$0xf]
    %v37 = vld [vmem:[%s1 + $0x38] sm:$0xf]
    %v38 = vld [vmem:[%s1 + $0x3c] sm:$0xf]
    %v39 = vld [vmem:[%s1 + $0x40] sm:$0xf]
    %v40 = vld [vmem:[%s1 + $0x44] sm:$0xf]
    %v41 = vld [vmem:[%s1 + $0x48] sm:$0xf]
    %v42 = vld [vmem:[%s1 + $0x4c] sm:$0xf]
    %v43 = vld [vmem:[%s1 + $0x50] sm:$0xf]
    %v44 = vld [vmem:[%s1 + $0x54] sm:$0xf]
    %v45 = vld [vmem:[%s1 + $0x58] sm:$0xf]
    %v46 = vld [vmem:[%s1 + $0x5c] sm:$0xf]
    %v47 = vld [vmem:[%s1 + $0x60] sm:$0xf]
    %v48 = vld [vmem:[%s1 + $0x64] sm:$0xf]
    %v49 = vld [vmem:[%s1 + $0x68] sm:$0xf]
    %v50 = vld [vmem:[%s1 + $0x6c] sm:$0xf]
    %v51 = vld [vmem:[%s1 + $0x70] sm:$0xf]
    %v52 = vld [vmem:[%s1 + $0x74] sm:$0xf]
    %v53 = vld [vmem:[%s1 + $0x78] sm:$0xf]
    %v54 = vld [vmem:[%s1 + $0x7c] sm:$0xf]
    %v55 = vld [vmem:[%s1 + $0x80] sm:$0xf]
    %v56 = vld [vmem:[%s1 + $0x84] sm:$0xf]
    %v57 = vld [vmem:[%s1 + $0x88] sm:$0xf]
    %v58 = vld [vmem:[%s1 + $0x8c] sm:$0xf]
    %v59 = vld [vmem:[%s1 + $0x90] sm:$0xf]
    %v60 = vld [vmem:[%s1 + $0x94] sm:$0xf]
    %v61 = vld [vmem:[%s1 + $0x98] sm:$0xf]
    %v62 = vld [vmem:[%s1 + $0x9c] sm:$0xf]
    %v63 = vld [vmem:[%s1 + $0xa0] sm:$0xf]
    %v64 = vld [vmem:[%s1 + $0xa4] sm:$0xf]
    %v65 = vld [vmem:[%s1 + $0xa8] sm:$0xf]
    %v66 = vld [vmem:[%s1 + $0xac] sm:$0xf]
    %v67 = vld [vmem:[%s1 + $0xb0] sm:$0xf]
    %v68 = vld [vmem:[%s1 + $0xb4] sm:$0xf]
    %v69 = vld [vmem:[%s1 + $0xb8] sm:$0xf]
    %v70 = vld [vmem:[%s1 + $0xbc] sm:$0xf]
    %v71 = vld [vmem:[%s1 + $0xc0] sm:$0xf]
    %v72 = vld [vmem:[%s1 + $0xc4] sm:$0xf]
    %v73 = vld [vmem:[%s1 + $0xc8] sm:$0xf]
    %v74 = vld [vmem:[%s1 + $0xcc] sm:$0xf]
    %v75 = vld [vmem:[%s1 + $0xd0] sm:$0xf]
    %v76 = vld [vmem:[%s1 + $0xd4] sm:$0xf]
    %v77 = vld [vmem:[%s1 + $0xd8] sm:$0xf]
    %v78 = vld [vmem:[%s1 + $0xdc] sm:$0xf]
    %v79 = vld [vmem:[%s1 + $0xe0] sm:$0xf]
    %v80 = vld [vmem:[%s1 + $0xe4] sm:$0xf]
    %v81 = vld [vmem:[%s1 + $0xe8] sm:$0xf]
    %v82 = vld [vmem:[%s1 + $0xec] sm:$0xf]
    %v83 = vld [vmem:[%s1 + $0xf0] sm:$0xf]
    %v84 = vld [vmem:[%s1 + $0xf4] sm:$0xf]
    %v85 = vld [vmem:[%s1 + $0xf8] sm:$0xf]
    %v86 = vld [vmem:[%s1 + $0xfc] sm:$0xf]
    %v87 = vld [vmem:[%s2] sm:$0x1]
    %v89 = vlaneseq
    %v90 = vshrl.u32 %v89, 7
    %v91 = vsub.s32 0, %v90
    %v92 = vrot.slane %v87, %v91
    %v102 = vunpack.c.l.b16 %v15
    %v103 = vunpack.c.h.b16 %v15
    %v104 = vunpack.c.l.b16 %v16
    %v105 = vunpack.c.h.b16 %v16
    %v106 = vunpack.c.l.b16 %v17
    %v107 = vunpack.c.h.b16 %v17
    %v108 = vunpack.c.l.b16 %v18
    %v109 = vunpack.c.h.b16 %v18
    %v110 = vunpack.c.l.b16 %v19
    %v111 = vunpack.c.h.b16 %v19
    %v112 = vunpack.c.l.b16 %v20
    %v113 = vunpack.c.h.b16 %v20
    %v114 = vunpack.c.l.b16 %v21
    %v115 = vunpack.c.h.b16 %v21
    %v116 = vunpack.c.l.b16 %v22
    %v117 = vunpack.c.h.b16 %v22
    %v118 = vpack.c.b16 %v106, %v102
    %v119 = vpack.c.b16 %v107, %v103
    %v120 = vpack.c.b16 %v108, %v104
    %v121 = vpack.c.b16 %v109, %v105
    %v122 = vpack.c.b16 %v114, %v110
    %v123 = vpack.c.b16 %v115, %v111
    %v124 = vpack.c.b16 %v116, %v112
    %v125 = vpack.c.b16 %v117, %v113
    %v198 = vunpack.c.l.b16 %v23
    %v199 = vunpack.c.l.b16 %v24
    %v200 = vunpack.c.l.b16 %v25
    %v201 = vunpack.c.l.b16 %v26
    %v202 = vunpack.c.l.b16 %v27
    %v203 = vunpack.c.l.b16 %v28
    %v204 = vunpack.c.l.b16 %v29
    %v205 = vunpack.c.l.b16 %v30
    %v206 = vunpack.c.l.b16 %v31
    %v207 = vunpack.c.l.b16 %v32
    %v208 = vunpack.c.l.b16 %v33
    %v209 = vunpack.c.l.b16 %v34
    %v210 = vunpack.c.l.b16 %v35
    %v211 = vunpack.c.l.b16 %v36
    %v212 = vunpack.c.l.b16 %v37
    %v213 = vunpack.c.l.b16 %v38
    %v214 = vunpack.c.l.b16 %v39
    %v215 = vunpack.c.l.b16 %v40
    %v216 = vunpack.c.l.b16 %v41
    %v217 = vunpack.c.l.b16 %v42
    %v218 = vunpack.c.l.b16 %v43
    %v219 = vunpack.c.l.b16 %v44
    %v220 = vunpack.c.l.b16 %v45
    %v221 = vunpack.c.l.b16 %v46
    %v222 = vunpack.c.l.b16 %v47
    %v223 = vunpack.c.l.b16 %v48
    %v224 = vunpack.c.l.b16 %v49
    %v225 = vunpack.c.l.b16 %v50
    %v226 = vunpack.c.l.b16 %v51
    %v227 = vunpack.c.l.b16 %v52
    %v228 = vunpack.c.l.b16 %v53
    %v229 = vunpack.c.l.b16 %v54
    %v230 = vunpack.c.l.b16 %v55
    %v231 = vunpack.c.l.b16 %v56
    %v232 = vunpack.c.l.b16 %v57
    %v233 = vunpack.c.l.b16 %v58
    %v234 = vunpack.c.l.b16 %v59
    %v235 = vunpack.c.l.b16 %v60
    %v236 = vunpack.c.l.b16 %v61
    %v237 = vunpack.c.l.b16 %v62
    %v238 = vunpack.c.l.b16 %v63
    %v239 = vunpack.c.l.b16 %v64
    %v240 = vunpack.c.l.b16 %v65
    %v241 = vunpack.c.l.b16 %v66
    %v242 = vunpack.c.l.b16 %v67
    %v243 = vunpack.c.l.b16 %v68
    %v244 = vunpack.c.l.b16 %v69
    %v245 = vunpack.c.l.b16 %v70
    %v246 = vunpack.c.l.b16 %v71
    %v247 = vunpack.c.l.b16 %v72
    %v248 = vunpack.c.l.b16 %v73
    %v249 = vunpack.c.l.b16 %v74
    %v250 = vunpack.c.l.b16 %v75
    %v251 = vunpack.c.l.b16 %v76
    %v252 = vunpack.c.l.b16 %v77
    %v253 = vunpack.c.l.b16 %v78
    %v254 = vunpack.c.l.b16 %v79
    %v255 = vunpack.c.l.b16 %v80
    %v256 = vunpack.c.l.b16 %v81
    %v257 = vunpack.c.l.b16 %v82
    %v258 = vunpack.c.l.b16 %v83
    %v259 = vunpack.c.l.b16 %v84
    %v260 = vunpack.c.l.b16 %v85
    %v261 = vunpack.c.l.b16 %v86
    %v262 = vpack.c.b16 %v199, %v198
    %v263 = vpack.c.b16 %v201, %v200
    %v264 = vpack.c.b16 %v203, %v202
    %v265 = vpack.c.b16 %v205, %v204
    %v266 = vpack.c.b16 %v207, %v206
    %v267 = vpack.c.b16 %v209, %v208
    %v268 = vpack.c.b16 %v211, %v210
    %v269 = vpack.c.b16 %v213, %v212
    %v270 = vpack.c.b16 %v215, %v214
    %v271 = vpack.c.b16 %v217, %v216
    %v272 = vpack.c.b16 %v219, %v218
    %v273 = vpack.c.b16 %v221, %v220
    %v274 = vpack.c.b16 %v223, %v222
    %v275 = vpack.c.b16 %v225, %v224
    %v276 = vpack.c.b16 %v227, %v226
    %v277 = vpack.c.b16 %v229, %v228
    %v278 = vpack.c.b16 %v231, %v230
    %v279 = vpack.c.b16 %v233, %v232
    %v280 = vpack.c.b16 %v235, %v234
    %v281 = vpack.c.b16 %v237, %v236
    %v282 = vpack.c.b16 %v239, %v238
    %v283 = vpack.c.b16 %v241, %v240
    %v284 = vpack.c.b16 %v243, %v242
    %v285 = vpack.c.b16 %v245, %v244
    %v286 = vpack.c.b16 %v247, %v246
    %v287 = vpack.c.b16 %v249, %v248
    %v288 = vpack.c.b16 %v251, %v250
    %v289 = vpack.c.b16 %v253, %v252
    %v290 = vpack.c.b16 %v255, %v254
    %v291 = vpack.c.b16 %v257, %v256
    %v292 = vpack.c.b16 %v259, %v258
    %v293 = vpack.c.b16 %v261, %v260
    %326 = vmatprep.subr.bf16.mxu0 0
    %327 = vmatpush1.bf16.msra.mxu0 %v262
    %328 = vmatprep.subr.bf16.mxu0 0
    %329 = vmatpush1.bf16.msra.mxu0 %v263
    %330 = vmatprep.subr.bf16.mxu0 0
    %331 = vmatpush1.bf16.msra.mxu0 %v264
    %332 = vmatprep.subr.bf16.mxu0 0
    %333 = vmatpush1.bf16.msra.mxu0 %v265
    %334 = vmatprep.subr.bf16.mxu0 0
    %335 = vmatpush1.bf16.msra.mxu0 %v266
    %336 = vmatprep.subr.bf16.mxu0 0
    %337 = vmatpush1.bf16.msra.mxu0 %v267
    %338 = vmatprep.subr.bf16.mxu0 0
    %339 = vmatpush1.bf16.msra.mxu0 %v268
    %340 = vmatprep.subr.bf16.mxu0 0
    %341 = vmatpush1.bf16.msra.mxu0 %v269
    %342 = vmatprep.subr.bf16.mxu0 0
    %343 = vmatpush1.bf16.msra.mxu0 %v270
    %344 = vmatprep.subr.bf16.mxu0 0
    %345 = vmatpush1.bf16.msra.mxu0 %v271
    %346 = vmatprep.subr.bf16.mxu0 0
    %347 = vmatpush1.bf16.msra.mxu0 %v272
    %348 = vmatprep.subr.bf16.mxu0 0
    %349 = vmatpush1.bf16.msra.mxu0 %v273
    %350 = vmatprep.subr.bf16.mxu0 0
    %351 = vmatpush1.bf16.msra.mxu0 %v274
    %352 = vmatprep.subr.bf16.mxu0 0
    %353 = vmatpush1.bf16.msra.mxu0 %v275
    %354 = vmatprep.subr.bf16.mxu0 0
    %355 = vmatpush1.bf16.msra.mxu0 %v276
    %356 = vmatprep.subr.bf16.mxu0 0
    %357 = vmatpush1.bf16.msra.mxu0 %v277
    %358 = vmatprep.mubr.bf16.mxu0 %v119
    %359 = vmatmul.mubr.bf16.gmra.mrb[0].mxu0 %v118
    %v360 = vpop.f32.mrb[0].mxu0
    %v361 = vadd.f32 %v92, %v360
    %v362 = vpop.f32.mrb[0].mxu0
    %v363 = vpop.f32.mrb[0].mxu0
    %v364 = vadd.f32 %v92, %v363
    %v365 = vpop.f32.mrb[0].mxu0
    %366 = vmatprep.mubr.bf16.mxu0 %v123
    %367 = vmatmul.mubr.bf16.gmra.mrb[0].mxu0 %v122
    %v368 = vpop.f32.mrb[0].mxu0
    %v369 = vadd.f32 %v92, %v368
    %v370 = vpop.f32.mrb[0].mxu0
    %v371 = vpop.f32.mrb[0].mxu0
    %v372 = vadd.f32 %v92, %v371
    %v373 = vpop.f32.mrb[0].mxu0
    %374 = vdwg.mxu0
    %375 = vmatprep.subr.bf16.mxu0 0
    %376 = vmatpush1.bf16.msra.mxu0 %v278
    %377 = vmatprep.subr.bf16.mxu0 0
    %378 = vmatpush1.bf16.msra.mxu0 %v279
    %379 = vmatprep.subr.bf16.mxu0 0
    %380 = vmatpush1.bf16.msra.mxu0 %v280
    %381 = vmatprep.subr.bf16.mxu0 0
    %382 = vmatpush1.bf16.msra.mxu0 %v281
    %383 = vmatprep.subr.bf16.mxu0 0
    %384 = vmatpush1.bf16.msra.mxu0 %v282
    %385 = vmatprep.subr.bf16.mxu0 0
    %386 = vmatpush1.bf16.msra.mxu0 %v283
    %387 = vmatprep.subr.bf16.mxu0 0
    %388 = vmatpush1.bf16.msra.mxu0 %v284
    %389 = vmatprep.subr.bf16.mxu0 0
    %390 = vmatpush1.bf16.msra.mxu0 %v285
    %391 = vmatprep.subr.bf16.mxu0 0
    %392 = vmatpush1.bf16.msra.mxu0 %v286
    %393 = vmatprep.subr.bf16.mxu0 0
    %394 = vmatpush1.bf16.msra.mxu0 %v287
    %395 = vmatprep.subr.bf16.mxu0 0
    %396 = vmatpush1.bf16.msra.mxu0 %v288
    %397 = vmatprep.subr.bf16.mxu0 0
    %398 = vmatpush1.bf16.msra.mxu0 %v289
    %399 = vmatprep.subr.bf16.mxu0 0
    %400 = vmatpush1.bf16.msra.mxu0 %v290
    %401 = vmatprep.subr.bf16.mxu0 0
    %402 = vmatpush1.bf16.msra.mxu0 %v291
    %403 = vmatprep.subr.bf16.mxu0 0
    %404 = vmatpush1.bf16.msra.mxu0 %v292
    %405 = vmatprep.subr.bf16.mxu0 0
    %406 = vmatpush1.bf16.msra.mxu0 %v293
    %407 = vmatprep.mubr.bf16.mxu0 %v121
    %408 = vmatmul.mubr.bf16.gmra.mrb[0].mxu0 %v120
    %v409 = vpop.f32.mrb[0].mxu0
    %v410 = vadd.f32 %v361, %v409
    %v411 = vpop.f32.mrb[0].mxu0
    %v412 = vpop.f32.mrb[0].mxu0
    %v413 = vadd.f32 %v364, %v412
    %v414 = vpop.f32.mrb[0].mxu0
    %415 = vmatprep.mubr.bf16.mxu0 %v125
    %416 = vmatmul.mubr.bf16.gmra.mrb[0].mxu0 %v124
    %v417 = vpop.f32.mrb[0].mxu0
    %v418 = vadd.f32 %v369, %v417
    %v419 = vpop.f32.mrb[0].mxu0
    %v420 = vpop.f32.mrb[0].mxu0
    %v421 = vadd.f32 %v372, %v420
    %v422 = vpop.f32.mrb[0].mxu0
    %423 = vdwg.mxu0
    %vm424 = vcmp.ge.f32.partialorder %v410, 0.0
    %vm425 = vcmp.ge.f32.partialorder %v413, 0.0
    %vm426 = vcmp.ge.f32.partialorder %v418, 0.0
    %vm427 = vcmp.ge.f32.partialorder %v421, 0.0
    %v428 = vmul.f32 %v410, 0.01
    %v429 = vmul.f32 %v413, 0.01
    %v430 = vmul.f32 %v418, 0.01
    %v431 = vmul.f32 %v421, 0.01
    %v432 = vsel %vm424, %v410, %v428
    %v433 = vsel %vm425, %v413, %v429
    %v434 = vsel %vm426, %v418, %v430
    %v435 = vsel %vm427, %v421, %v431
    %v436 = vpack.c.bf16 %v433, %v432
    %v437 = vpack.c.bf16 %v435, %v434
    %v440 = vunpack.c.l.b16 %v436
    %v441 = vunpack.c.h.b16 %v436
    %v442 = vunpack.c.l.b16 %v437
    %v443 = vunpack.c.h.b16 %v437
    %v444 = vpack.c.b16 %v440, %v440
    %v445 = vpack.c.b16 %v441, %v441
    %v446 = vpack.c.b16 %v442, %v442
    %v447 = vpack.c.b16 %v443, %v443
    %452 = vst [vmem:[#allocation2] sm:$0xf] %v444
    %453 = vst [vmem:[#allocation2 + $0x4] sm:$0xf] %v445
    %454 = vst [vmem:[#allocation2 + $0x8] sm:$0xf] %v446
    %455 = vst [vmem:[#allocation2 + $0xc] sm:$0xf] %v447
    // Predicated region
    $region14: #{_lambda_.4} parent=1 // pred_check
      _
    $region15: #{_lambda_.4} parent=1 // pred_check_branch
      %457 = sbr.rel (0) target = $region17
    $region16: #{_lambda_.4} parent=1 // pred_region
      // Predicated region
      $region18: #{_lambda_.4} parent=16 // pred_check
        _
      $region19: #{_lambda_.4} parent=16 // pred_check_branch
        %459 = sbr.rel (0) target = $region21
      $region20: #{_lambda_.4} parent=16 // pred_region
        // Predicated region
        $region22: #{_lambda_.4} parent=20 // pred_check
          _
        $region23: #{_lambda_.4} parent=20 // pred_check_branch
          %461 = sbr.rel target = $region25
        $region24: #{_lambda_.4} parent=20 // pred_region
          // Predicated region
          $region37: #{_lambda_.4} parent=24 // pred_check
            _
          $region38: #{_lambda_.4} parent=24 // pred_check_branch
            %480 = sbr.rel (0) target = $region40
          $region39: #{_lambda_.4} parent=24 // pred_region
            loop: start=0, step=1, limit=1
            $region41: #{_lambda_.4} parent=39 // loop_pre_header
              _
            $region42: #{_lambda_.4} parent=39 // loop_header
              %s482 = sphi 0, %s486
              %p483 = scmp.ge.s32.totalorder %s482, 1
              %s487 = sphi [#allocation2], [#allocation2]
              %s488 = sphi %s3, %s3
            $region43: #{_lambda_.4} parent=39 // loop_header_branch
              %485 = sbr.rel (%p483) target = $region47
            $region44: #{_lambda_.4} parent=39 // loop_body
              _
            $region45: #{_lambda_.4} parent=39 // loop_footer
              %s486 = sadd.s32 1, %s482
            $region46: #{_lambda_.4} parent=39 // loop_footer_branch
              %481 = sbr.rel target = $region42
            $region47: #{_lambda_.4} parent=39 // loop_exit
              _
            loop: start=0, step=1, limit=1
            $region48: #{_lambda_.4} parent=39 // loop_pre_header
              _
            $region49: #{_lambda_.4} parent=39 // loop_header
              %s491 = sphi 0, %s495
              %p492 = scmp.ge.s32.totalorder %s491, 1
              %s496 = sphi [#allocation2], [#allocation2]
              %s497 = sphi %s3, %s3
            $region50: #{_lambda_.4} parent=39 // loop_header_branch
              %494 = sbr.rel (%p492) target = $region54
            $region51: #{_lambda_.4} parent=39 // loop_body
              %v498 = vld [vmem:[%s496] sm:$0xf]
              %499 = vst [vmem:[%s497] sm:$0xf] %v498
              %v500 = vld [vmem:[%s496 + $0x4] sm:$0xf]
              %501 = vst [vmem:[%s497 + $0x4] sm:$0xf] %v500
              %v502 = vld [vmem:[%s496 + $0x8] sm:$0xf]
              %503 = vst [vmem:[%s497 + $0x8] sm:$0xf] %v502
            $region52: #{_lambda_.4} parent=39 // loop_footer
              %s495 = sadd.s32 1, %s491
            $region53: #{_lambda_.4} parent=39 // loop_footer_branch
              %490 = sbr.rel target = $region49
            $region54: #{_lambda_.4} parent=39 // loop_exit
              _
          $region40: #{_lambda_.4} parent=24 // pred_fallthru
            _
        $region25: #{_lambda_.4} parent=20 // pred_fallthru
          _
        // Predicated region
        $region26: #{_lambda_.4} parent=20 // pred_check
          _
        $region27: #{_lambda_.4} parent=20 // pred_check_branch
          %463 = sbr.rel (0) target = $region29
        $region28: #{_lambda_.4} parent=20 // pred_region
          loop: start=0, step=1, limit=1
          $region30: #{_lambda_.4} parent=28 // loop_pre_header
            _
          $region31: #{_lambda_.4} parent=28 // loop_header
            %s466 = sphi 0, %s470
            %p467 = scmp.ge.s32.totalorder %s466, 1
            %s471 = sphi [#allocation2], [#allocation2]
            %s472 = sphi %s3, %s3
          $region32: #{_lambda_.4} parent=28 // loop_header_branch
            %469 = sbr.rel (%p467) target = $region36
          $region33: #{_lambda_.4} parent=28 // loop_body
            %v473 = vld [vmem:[%s471] sm:$0xf]
            %474 = vst [vmem:[%s472] sm:$0xf] %v473
            %v475 = vld [vmem:[%s471 + $0x4] sm:$0xf]
            %476 = vst [vmem:[%s472 + $0x4] sm:$0xf] %v475
            %v477 = vld [vmem:[%s471 + $0x8] sm:$0xf]
            %478 = vst [vmem:[%s472 + $0x8] sm:$0xf] %v477
          $region34: #{_lambda_.4} parent=28 // loop_footer
            %s470 = sadd.s32 1, %s466
          $region35: #{_lambda_.4} parent=28 // loop_footer_branch
            %465 = sbr.rel target = $region31
          $region36: #{_lambda_.4} parent=28 // loop_exit
            _
        $region29: #{_lambda_.4} parent=20 // pred_fallthru
          _
      $region21: #{_lambda_.4} parent=16 // pred_fallthru
        _
      %504 = vnop
    $region17: #{_lambda_.4} parent=1 // pred_fallthru
      _
    // Predicated region
    $region55: #{_lambda_.4} parent=1 // pred_check
      _
    $region56: #{_lambda_.4} parent=1 // pred_check_branch
      %506 = sbr.rel (0) target = $region58
    $region57: #{_lambda_.4} parent=1 // pred_region
      _
    $region58: #{_lambda_.4} parent=1 // pred_fallthru
      _

// kernel: _lambda_.5
$region0: #{_lambda_.5}
  #allocation0 [shape = 'u32[]', space=smem, size = 0x4, offset = 0x4, fixed_abs, tag = 'smem constant byte address 0x4 - core index']
  #allocation1 [shape = 'u32[144,128]{1,0:T(1,128)}', space=vmem, size = 0x12000, scoped, tag = 'internal scratch']
  %s0 = inlined_call_operand.vmem [shape: bf16[2,576], index: 0, kind: input, shape index: {}]
  %s1 = inlined_call_operand.vmem [shape: bf16[576,128], index: 1, kind: input, shape index: {}]
  %s2 = inlined_call_operand.vmem [shape: f32[1,128], index: 2, kind: input, shape index: {}]
  %s3 = inlined_call_operand.vmem [shape: bf16[128,128], index: 3, kind: input, shape index: {}]
  %s4 = inlined_call_operand.vmem [shape: f32[1,128], index: 4, kind: input, shape index: {}]
  %s5 = inlined_call_operand.vmem [shape: bf16[128,128], index: 5, kind: input, shape index: {}]
  %s6 = inlined_call_operand.vmem [shape: f32[1,128], index: 6, kind: input, shape index: {}]
  %s7 = inlined_call_operand.hbm [shape: f32[2,128], index: 7, kind: output, shape index: {}]
  %s8 = sld [smem:[#allocation0]]
  $region38: #{_lambda_.5} parent=0
    _
  %s10 = ssub.s32 1, %s8
  %s11 = scalar_select 0, %s10, %s8
  $region1: #{_lambda_.5} parent=0
    #allocation2 [shape = 'u8[8192]{0}', space=vmem, size = 0x2000, scoped, tag = 'output window, operand 0, single buffered']
    #allocation3 [shape = 's32[1]{0}', space=sflag, size = 0x4, scoped, tag = 'scoped memory for _lambda_.5']
    %12 = vsyncpa [#allocation3], 0
    // Predicated region
    $region2: #{_lambda_.5} parent=1 // pred_check
      _
    $region3: #{_lambda_.5} parent=1 // pred_check_branch
      %14 = sbr.rel (0) target = $region5
    $region4: #{_lambda_.5} parent=1 // pred_region
      _
    $region5: #{_lambda_.5} parent=1 // pred_fallthru
      _
    // Predicated region
    $region6: #{_lambda_.5} parent=1 // pred_check
      _
    $region7: #{_lambda_.5} parent=1 // pred_check_branch
      %16 = sbr.rel (0) target = $region9
    $region8: #{_lambda_.5} parent=1 // pred_region
      _
    $region9: #{_lambda_.5} parent=1 // pred_fallthru
      _
    // Predicated region
    $region10: #{_lambda_.5} parent=1 // pred_check
      _
    $region11: #{_lambda_.5} parent=1 // pred_check_branch
      %18 = sbr.rel (0) target = $region13
    $region12: #{_lambda_.5} parent=1 // pred_region
      _
    $region13: #{_lambda_.5} parent=1 // pred_fallthru
      _
    // Predicated region
    $region14: #{_lambda_.5} parent=1 // pred_check
      _
    $region15: #{_lambda_.5} parent=1 // pred_check_branch
      %20 = sbr.rel (0) target = $region17
    $region16: #{_lambda_.5} parent=1 // pred_region
      _
    $region17: #{_lambda_.5} parent=1 // pred_fallthru
      _
    // Predicated region
    $region18: #{_lambda_.5} parent=1 // pred_check
      _
    $region19: #{_lambda_.5} parent=1 // pred_check_branch
      %22 = sbr.rel (0) target = $region21
    $region20: #{_lambda_.5} parent=1 // pred_region
      _
    $region21: #{_lambda_.5} parent=1 // pred_fallthru
      _
    // Predicated region
    $region22: #{_lambda_.5} parent=1 // pred_check
      _
    $region23: #{_lambda_.5} parent=1 // pred_check_branch
      %24 = sbr.rel (0) target = $region25
    $region24: #{_lambda_.5} parent=1 // pred_region
      _
    $region25: #{_lambda_.5} parent=1 // pred_fallthru
      _
    // Predicated region
    $region26: #{_lambda_.5} parent=1 // pred_check
      _
    $region27: #{_lambda_.5} parent=1 // pred_check_branch
      %26 = sbr.rel (0) target = $region29
    $region28: #{_lambda_.5} parent=1 // pred_region
      _
    $region29: #{_lambda_.5} parent=1 // pred_fallthru
      _
    %v28 = vld [vmem:[%s0] sm:$0x1f]
    %v29 = vld [vmem:[%s0 + $0x5] sm:$0x1f]
    %v30 = vld [vmem:[%s0 + $0xa] sm:$0x1f]
    %v31 = vld [vmem:[%s0 + $0xf] sm:$0x1f]
    %v32 = vld [vmem:[%s0 + $0x14] sm:$0x1f]
    %v33 = vld [vmem:[%s0 + $0x19] sm:$0x1f]
    %v34 = vld [vmem:[%s0 + $0x1e] sm:$0x1f]
    %v35 = vld [vmem:[%s0 + $0x23] sm:$0x1f]
    %v36 = vld [vmem:[%s1] sm:$0xf]
    %v37 = vld [vmem:[%s1 + $0x4] sm:$0xf]
    %v38 = vld [vmem:[%s1 + $0x8] sm:$0xf]
    %v39 = vld [vmem:[%s1 + $0xc] sm:$0xf]
    %v40 = vld [vmem:[%s1 + $0x10] sm:$0xf]
    %v41 = vld [vmem:[%s1 + $0x14] sm:$0xf]
    %v42 = vld [vmem:[%s1 + $0x18] sm:$0xf]
    %v43 = vld [vmem:[%s1 + $0x1c] sm:$0xf]
    %v44 = vld [vmem:[%s1 + $0x20] sm:$0xf]
    %v45 = vld [vmem:[%s1 + $0x24] sm:$0xf]
    %v46 = vld [vmem:[%s1 + $0x28] sm:$0xf]
    %v47 = vld [vmem:[%s1 + $0x2c] sm:$0xf]
    %v48 = vld [vmem:[%s1 + $0x30] sm:$0xf]
    %v49 = vld [vmem:[%s1 + $0x34] sm:$0xf]
    %v50 = vld [vmem:[%s1 + $0x38] sm:$0xf]
    %v51 = vld [vmem:[%s1 + $0x3c] sm:$0xf]
    %v52 = vld [vmem:[%s1 + $0x40] sm:$0xf]
    %v53 = vld [vmem:[%s1 + $0x44] sm:$0xf]
    %v54 = vld [vmem:[%s1 + $0x48] sm:$0xf]
    %v55 = vld [vmem:[%s1 + $0x4c] sm:$0xf]
    %v56 = vld [vmem:[%s1 + $0x50] sm:$0xf]
    %v57 = vld [vmem:[%s1 + $0x54] sm:$0xf]
    %v58 = vld [vmem:[%s1 + $0x58] sm:$0xf]
    %v59 = vld [vmem:[%s1 + $0x5c] sm:$0xf]
    %v60 = vld [vmem:[%s1 + $0x60] sm:$0xf]
    %v61 = vld [vmem:[%s1 + $0x64] sm:$0xf]
    %v62 = vld [vmem:[%s1 + $0x68] sm:$0xf]
    %v63 = vld [vmem:[%s1 + $0x6c] sm:$0xf]
    %v64 = vld [vmem:[%s1 + $0x70] sm:$0xf]
    %v65 = vld [vmem:[%s1 + $0x74] sm:$0xf]
    %v66 = vld [vmem:[%s1 + $0x78] sm:$0xf]
    %v67 = vld [vmem:[%s1 + $0x7c] sm:$0xf]
    %v68 = vld [vmem:[%s1 + $0x80] sm:$0xf]
    %v69 = vld [vmem:[%s1 + $0x84] sm:$0xf]
    %v70 = vld [vmem:[%s1 + $0x88] sm:$0xf]
    %v71 = vld [vmem:[%s1 + $0x8c] sm:$0xf]
    %v72 = vld [vmem:[%s1 + $0x90] sm:$0xf]
    %v73 = vld [vmem:[%s1 + $0x94] sm:$0xf]
    %v74 = vld [vmem:[%s1 + $0x98] sm:$0xf]
    %v75 = vld [vmem:[%s1 + $0x9c] sm:$0xf]
    %v76 = vld [vmem:[%s1 + $0xa0] sm:$0xf]
    %v77 = vld [vmem:[%s1 + $0xa4] sm:$0xf]
    %v78 = vld [vmem:[%s1 + $0xa8] sm:$0xf]
    %v79 = vld [vmem:[%s1 + $0xac] sm:$0xf]
    %v80 = vld [vmem:[%s1 + $0xb0] sm:$0xf]
    %v81 = vld [vmem:[%s1 + $0xb4] sm:$0xf]
    %v82 = vld [vmem:[%s1 + $0xb8] sm:$0xf]
    %v83 = vld [vmem:[%s1 + $0xbc] sm:$0xf]
    %v84 = vld [vmem:[%s1 + $0xc0] sm:$0xf]
    %v85 = vld [vmem:[%s1 + $0xc4] sm:$0xf]
    %v86 = vld [vmem:[%s1 + $0xc8] sm:$0xf]
    %v87 = vld [vmem:[%s1 + $0xcc] sm:$0xf]
    %v88 = vld [vmem:[%s1 + $0xd0] sm:$0xf]
    %v89 = vld [vmem:[%s1 + $0xd4] sm:$0xf]
    %v90 = vld [vmem:[%s1 + $0xd8] sm:$0xf]
    %v91 = vld [vmem:[%s1 + $0xdc] sm:$0xf]
    %v92 = vld [vmem:[%s1 + $0xe0] sm:$0xf]
    %v93 = vld [vmem:[%s1 + $0xe4] sm:$0xf]
    %v94 = vld [vmem:[%s1 + $0xe8] sm:$0xf]
    %v95 = vld [vmem:[%s1 + $0xec] sm:$0xf]
    %v96 = vld [vmem:[%s1 + $0xf0] sm:$0xf]
    %v97 = vld [vmem:[%s1 + $0xf4] sm:$0xf]
    %v98 = vld [vmem:[%s1 + $0xf8] sm:$0xf]
    %v99 = vld [vmem:[%s1 + $0xfc] sm:$0xf]
    %v100 = vld [vmem:[%s1 + $0x100] sm:$0xf]
    %v101 = vld [vmem:[%s1 + $0x104] sm:$0xf]
    %v102 = vld [vmem:[%s1 + $0x108] sm:$0xf]
    %v103 = vld [vmem:[%s1 + $0x10c] sm:$0xf]
    %v104 = vld [vmem:[%s1 + $0x110] sm:$0xf]
    %v105 = vld [vmem:[%s1 + $0x114] sm:$0xf]
    %v106 = vld [vmem:[%s1 + $0x118] sm:$0xf]
    %v107 = vld [vmem:[%s1 + $0x11c] sm:$0xf]
    %v108 = vld [vmem:[%s2] sm:$0x1]
    %v110 = vlaneseq
    %v111 = vshrl.u32 %v110, 7
    %v112 = vsub.s32 0, %v111
    %v113 = vrot.slane %v108, %v112
    %v123 = vcombine.low %v28, %v29
    %v124 = vcombine.high %v28, %v29
    %v125 = vcombine.low %v30, %v31
    %v126 = vcombine.high %v30, %v31
    %v127 = vcombine.low %v32, %v33
    %v128 = vcombine.high %v32, %v33
    %v129 = vcombine.low %v34, %v35
    %v130 = vcombine.high %v34, %v35
    %v132 = vunpack.c.l.s4 1966171168
    %v133 = vunpack.c.0.s8 %v132
    %v134 = vlaneseq
    %v135 = vshrl.u32 %v134, 7
    %v136 = vsub.s32 %v133, %v135
    %v137 = vrot.slane %v123, %v136
    %v139 = vunpack.c.l.s4 1966171168
    %v140 = vunpack.c.0.s8 %v139
    %v141 = vlaneseq
    %v142 = vshrl.u32 %v141, 7
    %v143 = vsub.s32 %v140, %v142
    %v144 = vrot.slane %v124, %v143
    %v146 = vunpack.c.l.s4 1966171168
    %v147 = vunpack.c.0.s8 %v146
    %v148 = vlaneseq
    %v149 = vshrl.u32 %v148, 7
    %v150 = vsub.s32 %v147, %v149
    %v151 = vrot.slane %v125, %v150
    %v153 = vunpack.c.l.s4 1966171168
    %v154 = vunpack.c.0.s8 %v153
    %v155 = vlaneseq
    %v156 = vshrl.u32 %v155, 7
    %v157 = vsub.s32 %v154, %v156
    %v158 = vrot.slane %v126, %v157
    %v160 = vunpack.c.l.s4 1966171168
    %v161 = vunpack.c.0.s8 %v160
    %v162 = vlaneseq
    %v163 = vshrl.u32 %v162, 7
    %v164 = vsub.s32 %v161, %v163
    %v165 = vrot.slane %v127, %v164
    %v167 = vunpack.c.l.s4 1966171168
    %v168 = vunpack.c.0.s8 %v167
    %v169 = vlaneseq
    %v170 = vshrl.u32 %v169, 7
    %v171 = vsub.s32 %v168, %v170
    %v172 = vrot.slane %v128, %v171
    %v174 = vunpack.c.l.s4 1966171168
    %v175 = vunpack.c.0.s8 %v174
    %v176 = vlaneseq
    %v177 = vshrl.u32 %v176, 7
    %v178 = vsub.s32 %v175, %v177
    %v179 = vrot.slane %v129, %v178
    %v181 = vunpack.c.l.s4 1966171168
    %v182 = vunpack.c.0.s8 %v181
    %v183 = vlaneseq
    %v184 = vshrl.u32 %v183, 7
    %v185 = vsub.s32 %v182, %v184
    %v186 = vrot.slane %v130, %v185
    %v187 = vcombine.low %v137, %v151
    %v188 = vcombine.high %v137, %v151
    %v189 = vcombine.low %v144, %v158
    %v190 = vcombine.low %v165, %v179
    %v191 = vcombine.high %v165, %v179
    %v192 = vcombine.low %v172, %v186
    %v194 = vunpack.c.l.s4 1966171168
    %v195 = vunpack.c.0.s8 %v194
    %v196 = vlaneseq
    %v197 = vshrl.u32 %v196, 7
    %v198 = vsub.s32 %v195, %v197
    %v199 = vrot.slane %v187, %v198
    %v201 = vunpack.c.l.s4 1966171168
    %v202 = vunpack.c.0.s8 %v201
    %v203 = vlaneseq
    %v204 = vshrl.u32 %v203, 7
    %v205 = vsub.s32 %v202, %v204
    %v206 = vrot.slane %v189, %v205
    %v208 = vunpack.c.l.s4 1966171168
    %v209 = vunpack.c.0.s8 %v208
    %v210 = vlaneseq
    %v211 = vshrl.u32 %v210, 7
    %v212 = vsub.s32 %v209, %v211
    %v213 = vrot.slane %v188, %v212
    %v215 = vunpack.c.l.s4 1966171168
    %v216 = vunpack.c.0.s8 %v215
    %v217 = vlaneseq
    %v218 = vshrl.u32 %v217, 7
    %v219 = vsub.s32 %v216, %v218
    %v220 = vrot.slane %v190, %v219
    %v222 = vunpack.c.l.s4 1966171168
    %v223 = vunpack.c.0.s8 %v222
    %v224 = vlaneseq
    %v225 = vshrl.u32 %v224, 7
    %v226 = vsub.s32 %v223, %v225
    %v227 = vrot.slane %v192, %v226
    %v229 = vunpack.c.l.s4 1966171168
    %v230 = vunpack.c.0.s8 %v229
    %v231 = vlaneseq
    %v232 = vshrl.u32 %v231, 7
    %v233 = vsub.s32 %v230, %v232
    %v234 = vrot.slane %v191, %v233
    %v235 = vcombine.low %v199, %v220
    %v236 = vcombine.high %v199, %v220
    %v237 = vcombine.low %v206, %v227
    %v238 = vcombine.low %v213, %v234
    %v239 = vcombine.high %v213, %v234
    %v316 = vunpack.c.l.b16 %v36
    %v317 = vunpack.c.l.b16 %v37
    %v318 = vunpack.c.l.b16 %v38
    %v319 = vunpack.c.l.b16 %v39
    %v320 = vunpack.c.l.b16 %v40
    %v321 = vunpack.c.l.b16 %v41
    %v322 = vunpack.c.l.b16 %v42
    %v323 = vunpack.c.l.b16 %v43
    %v324 = vunpack.c.l.b16 %v44
    %v325 = vunpack.c.l.b16 %v45
    %v326 = vunpack.c.l.b16 %v46
    %v327 = vunpack.c.l.b16 %v47
    %v328 = vunpack.c.l.b16 %v48
    %v329 = vunpack.c.l.b16 %v49
    %v330 = vunpack.c.l.b16 %v50
    %v331 = vunpack.c.l.b16 %v51
    %v332 = vunpack.c.l.b16 %v52
    %v333 = vunpack.c.l.b16 %v53
    %v334 = vunpack.c.l.b16 %v54
    %v335 = vunpack.c.l.b16 %v55
    %v336 = vunpack.c.l.b16 %v56
    %v337 = vunpack.c.l.b16 %v57
    %v338 = vunpack.c.l.b16 %v58
    %v339 = vunpack.c.l.b16 %v59
    %v340 = vunpack.c.l.b16 %v60
    %v341 = vunpack.c.l.b16 %v61
    %v342 = vunpack.c.l.b16 %v62
    %v343 = vunpack.c.l.b16 %v63
    %v344 = vunpack.c.l.b16 %v64
    %v345 = vunpack.c.l.b16 %v65
    %v346 = vunpack.c.l.b16 %v66
    %v347 = vunpack.c.l.b16 %v67
    %v348 = vunpack.c.l.b16 %v68
    %v349 = vunpack.c.l.b16 %v69
    %v350 = vunpack.c.l.b16 %v70
    %v351 = vunpack.c.l.b16 %v71
    %v352 = vunpack.c.l.b16 %v72
    %v353 = vunpack.c.l.b16 %v73
    %v354 = vunpack.c.l.b16 %v74
    %v355 = vunpack.c.l.b16 %v75
    %v356 = vunpack.c.l.b16 %v76
    %v357 = vunpack.c.l.b16 %v77
    %v358 = vunpack.c.l.b16 %v78
    %v359 = vunpack.c.l.b16 %v79
    %v360 = vunpack.c.l.b16 %v80
    %v361 = vunpack.c.l.b16 %v81
    %v362 = vunpack.c.l.b16 %v82
    %v363 = vunpack.c.l.b16 %v83
    %v364 = vunpack.c.l.b16 %v84
    %v365 = vunpack.c.l.b16 %v85
    %v366 = vunpack.c.l.b16 %v86
    %v367 = vunpack.c.l.b16 %v87
    %v368 = vunpack.c.l.b16 %v88
    %v369 = vunpack.c.l.b16 %v89
    %v370 = vunpack.c.l.b16 %v90
    %v371 = vunpack.c.l.b16 %v91
    %v372 = vunpack.c.l.b16 %v92
    %v373 = vunpack.c.l.b16 %v93
    %v374 = vunpack.c.l.b16 %v94
    %v375 = vunpack.c.l.b16 %v95
    %v376 = vunpack.c.l.b16 %v96
    %v377 = vunpack.c.l.b16 %v97
    %v378 = vunpack.c.l.b16 %v98
    %v379 = vunpack.c.l.b16 %v99
    %v380 = vunpack.c.l.b16 %v100
    %v381 = vunpack.c.l.b16 %v101
    %v382 = vunpack.c.l.b16 %v102
    %v383 = vunpack.c.l.b16 %v103
    %v384 = vunpack.c.l.b16 %v104
    %v385 = vunpack.c.l.b16 %v105
    %v386 = vunpack.c.l.b16 %v106
    %v387 = vunpack.c.l.b16 %v107
    %v388 = vpack.c.b16 %v317, %v316
    %v389 = vpack.c.b16 %v319, %v318
    %v390 = vpack.c.b16 %v321, %v320
    %v391 = vpack.c.b16 %v323, %v322
    %v392 = vpack.c.b16 %v325, %v324
    %v393 = vpack.c.b16 %v327, %v326
    %v394 = vpack.c.b16 %v329, %v328
    %v395 = vpack.c.b16 %v331, %v330
    %v396 = vpack.c.b16 %v333, %v332
    %v397 = vpack.c.b16 %v335, %v334
    %v398 = vpack.c.b16 %v337, %v336
    %v399 = vpack.c.b16 %v339, %v338
    %v400 = vpack.c.b16 %v341, %v340
    %v401 = vpack.c.b16 %v343, %v342
    %v402 = vpack.c.b16 %v345, %v344
    %v403 = vpack.c.b16 %v347, %v346
    %v404 = vpack.c.b16 %v349, %v348
    %v405 = vpack.c.b16 %v351, %v350
    %v406 = vpack.c.b16 %v353, %v352
    %v407 = vpack.c.b16 %v355, %v354
    %v408 = vpack.c.b16 %v357, %v356
    %v409 = vpack.c.b16 %v359, %v358
    %v410 = vpack.c.b16 %v361, %v360
    %v411 = vpack.c.b16 %v363, %v362
    %v412 = vpack.c.b16 %v365, %v364
    %v413 = vpack.c.b16 %v367, %v366
    %v414 = vpack.c.b16 %v369, %v368
    %v415 = vpack.c.b16 %v371, %v370
    %v416 = vpack.c.b16 %v373, %v372
    %v417 = vpack.c.b16 %v375, %v374
    %v418 = vpack.c.b16 %v377, %v376
    %v419 = vpack.c.b16 %v379, %v378
    %v420 = vpack.c.b16 %v381, %v380
    %v421 = vpack.c.b16 %v383, %v382
    %v422 = vpack.c.b16 %v385, %v384
    %v423 = vpack.c.b16 %v387, %v386
    %vm460 = vcmask 523264
    %v462 = vsel %vm460, %v237, 0
    %464 = vmatprep.subr.bf16.mxu0 0
    %465 = vmatpush1.bf16.msra.mxu0 %v388
    %466 = vmatprep.subr.bf16.mxu0 0
    %467 = vmatpush1.bf16.msra.mxu0 %v389
    %468 = vmatprep.subr.bf16.mxu0 0
    %469 = vmatpush1.bf16.msra.mxu0 %v390
    %470 = vmatprep.subr.bf16.mxu0 0
    %471 = vmatpush1.bf16.msra.mxu0 %v391
    %472 = vmatprep.subr.bf16.mxu0 0
    %473 = vmatpush1.bf16.msra.mxu0 %v392
    %474 = vmatprep.subr.bf16.mxu0 0
    %475 = vmatpush1.bf16.msra.mxu0 %v393
    %476 = vmatprep.subr.bf16.mxu0 0
    %477 = vmatpush1.bf16.msra.mxu0 %v394
    %478 = vmatprep.subr.bf16.mxu0 0
    %479 = vmatpush1.bf16.msra.mxu0 %v395
    %480 = vmatprep.subr.bf16.mxu0 0
    %481 = vmatpush1.bf16.msra.mxu0 %v396
    %482 = vmatprep.subr.bf16.mxu0 0
    %483 = vmatpush1.bf16.msra.mxu0 %v397
    %484 = vmatprep.subr.bf16.mxu0 0
    %485 = vmatpush1.bf16.msra.mxu0 %v398
    %486 = vmatprep.subr.bf16.mxu0 0
    %487 = vmatpush1.bf16.msra.mxu0 %v399
    %488 = vmatprep.subr.bf16.mxu0 0
    %489 = vmatpush1.bf16.msra.mxu0 %v400
    %490 = vmatprep.subr.bf16.mxu0 0
    %491 = vmatpush1.bf16.msra.mxu0 %v401
    %492 = vmatprep.subr.bf16.mxu0 0
    %493 = vmatpush1.bf16.msra.mxu0 %v402
    %494 = vmatprep.subr.bf16.mxu0 0
    %495 = vmatpush1.bf16.msra.mxu0 %v403
    %496 = vmatprep.mubr.bf16.mxu0 %v238
    %497 = vmatmul.mubr.bf16.gmra.mrb[0].mxu0 %v235
    %v498 = vpop.f32.mrb[0].mxu0
    %v499 = vadd.f32 %v113, %v498
    %v500 = vpop.f32.mrb[0].mxu0
    %v501 = vpop.f32.mrb[0].mxu0
    %v502 = vadd.f32 %v113, %v501
    %v503 = vpop.f32.mrb[0].mxu0
    %504 = vdwg.mxu0
    %505 = vmatprep.subr.bf16.mxu0 0
    %506 = vmatpush1.bf16.msra.mxu0 %v404
    %507 = vmatprep.subr.bf16.mxu0 0
    %508 = vmatpush1.bf16.msra.mxu0 %v405
    %509 = vmatprep.subr.bf16.mxu0 0
    %510 = vmatpush1.bf16.msra.mxu0 %v406
    %511 = vmatprep.subr.bf16.mxu0 0
    %512 = vmatpush1.bf16.msra.mxu0 %v407
    %513 = vmatprep.subr.bf16.mxu0 0
    %514 = vmatpush1.bf16.msra.mxu0 %v408
    %515 = vmatprep.subr.bf16.mxu0 0
    %516 = vmatpush1.bf16.msra.mxu0 %v409
    %517 = vmatprep.subr.bf16.mxu0 0
    %518 = vmatpush1.bf16.msra.mxu0 %v410
    %519 = vmatprep.subr.bf16.mxu0 0
    %520 = vmatpush1.bf16.msra.mxu0 %v411
    %521 = vmatprep.subr.bf16.mxu0 0
    %522 = vmatpush1.bf16.msra.mxu0 %v412
    %523 = vmatprep.subr.bf16.mxu0 0
    %524 = vmatpush1.bf16.msra.mxu0 %v413
    %525 = vmatprep.subr.bf16.mxu0 0
    %526 = vmatpush1.bf16.msra.mxu0 %v414
    %527 = vmatprep.subr.bf16.mxu0 0
    %528 = vmatpush1.bf16.msra.mxu0 %v415
    %529 = vmatprep.subr.bf16.mxu0 0
    %530 = vmatpush1.bf16.msra.mxu0 %v416
    %531 = vmatprep.subr.bf16.mxu0 0
    %532 = vmatpush1.bf16.msra.mxu0 %v417
    %533 = vmatprep.subr.bf16.mxu0 0
    %534 = vmatpush1.bf16.msra.mxu0 %v418
    %535 = vmatprep.subr.bf16.mxu0 0
    %536 = vmatpush1.bf16.msra.mxu0 %v419
    %537 = vmatprep.mubr.bf16.mxu0 %v239
    %538 = vmatmul.mubr.bf16.gmra.mrb[0].mxu0 %v236
    %v539 = vpop.f32.mrb[0].mxu0
    %v540 = vadd.f32 %v499, %v539
    %v541 = vpop.f32.mrb[0].mxu0
    %v542 = vpop.f32.mrb[0].mxu0
    %v543 = vadd.f32 %v502, %v542
    %v544 = vpop.f32.mrb[0].mxu0
    %545 = vdwg.mxu0
    %546 = vmatprep.subr.bf16.mxu0 0
    %547 = vmatpush1.bf16.msra.mxu0 %v420
    %548 = vmatprep.subr.bf16.mxu0 0
    %549 = vmatpush1.bf16.msra.mxu0 %v421
    %550 = vmatprep.subr.bf16.mxu0 0
    %551 = vmatpush1.bf16.msra.mxu0 %v422
    %552 = vmatprep.subr.bf16.mxu0 0
    %553 = vmatpush1.bf16.msra.mxu0 %v423
    %554 = vmatprep.subr.bf16.mxu0 0
    %555 = vmatpush1.bf16.msra.mxu0 0
    %556 = vmatprep.subr.bf16.mxu0 0
    %557 = vmatpush1.bf16.msra.mxu0 0
    %558 = vmatprep.subr.bf16.mxu0 0
    %559 = vmatpush1.bf16.msra.mxu0 0
    %560 = vmatprep.subr.bf16.mxu0 0
    %561 = vmatpush1.bf16.msra.mxu0 0
    %562 = vmatprep.subr.bf16.mxu0 0
    %563 = vmatpush1.bf16.msra.mxu0 0
    %564 = vmatprep.subr.bf16.mxu0 0
    %565 = vmatpush1.bf16.msra.mxu0 0
    %566 = vmatprep.subr.bf16.mxu0 0
    %567 = vmatpush1.bf16.msra.mxu0 0
    %568 = vmatprep.subr.bf16.mxu0 0
    %569 = vmatpush1.bf16.msra.mxu0 0
    %570 = vmatprep.subr.bf16.mxu0 0
    %571 = vmatpush1.bf16.msra.mxu0 0
    %572 = vmatprep.subr.bf16.mxu0 0
    %573 = vmatpush1.bf16.msra.mxu0 0
    %574 = vmatprep.subr.bf16.mxu0 0
    %575 = vmatpush1.bf16.msra.mxu0 0
    %576 = vmatprep.subr.bf16.mxu0 0
    %577 = vmatpush1.bf16.msra.mxu0 0
    %578 = vmatprep.mubr.bf16.mxu0 0
    %579 = vmatmul.mubr.bf16.gmra.mrb[0].mxu0 %v462
    %v580 = vpop.f32.mrb[0].mxu0
    %v581 = vadd.f32 %v540, %v580
    %v582 = vpop.f32.mrb[0].mxu0
    %v583 = vpop.f32.mrb[0].mxu0
    %v584 = vadd.f32 %v543, %v583
    %v585 = vpop.f32.mrb[0].mxu0
    %586 = vdwg.mxu0
    %vm587 = vcmp.ge.f32.partialorder %v581, 0.0
    %vm588 = vcmp.ge.f32.partialorder %v584, 0.0
    %v589 = vmul.f32 %v581, 0.01
    %v590 = vmul.f32 %v584, 0.01
    %v591 = vsel %vm587, %v581, %v589
    %v592 = vsel %vm588, %v584, %v590
    %v593 = vld [vmem:[%s3] sm:$0xf]
    %v594 = vld [vmem:[%s3 + $0x4] sm:$0xf]
    %v595 = vld [vmem:[%s3 + $0x8] sm:$0xf]
    %v596 = vld [vmem:[%s3 + $0xc] sm:$0xf]
    %v597 = vld [vmem:[%s3 + $0x10] sm:$0xf]
    %v598 = vld [vmem:[%s3 + $0x14] sm:$0xf]
    %v599 = vld [vmem:[%s3 + $0x18] sm:$0xf]
    %v600 = vld [vmem:[%s3 + $0x1c] sm:$0xf]
    %v601 = vld [vmem:[%s3 + $0x20] sm:$0xf]
    %v602 = vld [vmem:[%s3 + $0x24] sm:$0xf]
    %v603 = vld [vmem:[%s3 + $0x28] sm:$0xf]
    %v604 = vld [vmem:[%s3 + $0x2c] sm:$0xf]
    %v605 = vld [vmem:[%s3 + $0x30] sm:$0xf]
    %v606 = vld [vmem:[%s3 + $0x34] sm:$0xf]
    %v607 = vld [vmem:[%s3 + $0x38] sm:$0xf]
    %v608 = vld [vmem:[%s3 + $0x3c] sm:$0xf]
    %v609 = vld [vmem:[%s4] sm:$0x1]
    %v610 = vpack.c.bf16 %v592, %v591
    %v612 = vlaneseq
    %v613 = vshrl.u32 %v612, 7
    %v614 = vsub.s32 0, %v613
    %v615 = vrot.slane %v609, %v614
    %v633 = vunpack.c.l.b16 %v593
    %v634 = vunpack.c.l.b16 %v594
    %v635 = vunpack.c.l.b16 %v595
    %v636 = vunpack.c.l.b16 %v596
    %v637 = vunpack.c.l.b16 %v597
    %v638 = vunpack.c.l.b16 %v598
    %v639 = vunpack.c.l.b16 %v599
    %v640 = vunpack.c.l.b16 %v600
    %v641 = vunpack.c.l.b16 %v601
    %v642 = vunpack.c.l.b16 %v602
    %v643 = vunpack.c.l.b16 %v603
    %v644 = vunpack.c.l.b16 %v604
    %v645 = vunpack.c.l.b16 %v605
    %v646 = vunpack.c.l.b16 %v606
    %v647 = vunpack.c.l.b16 %v607
    %v648 = vunpack.c.l.b16 %v608
    %v649 = vpack.c.b16 %v634, %v633
    %v650 = vpack.c.b16 %v636, %v635
    %v651 = vpack.c.b16 %v638, %v637
    %v652 = vpack.c.b16 %v640, %v639
    %v653 = vpack.c.b16 %v642, %v641
    %v654 = vpack.c.b16 %v644, %v643
    %v655 = vpack.c.b16 %v646, %v645
    %v656 = vpack.c.b16 %v648, %v647
    %665 = vmatprep.subr.bf16.mxu0 0
    %666 = vmatpush1.bf16.msra.mxu0 %v649
    %667 = vmatprep.subr.bf16.mxu0 0
    %668 = vmatpush1.bf16.msra.mxu0 %v650
    %669 = vmatprep.subr.bf16.mxu0 0
    %670 = vmatpush1.bf16.msra.mxu0 %v651
    %671 = vmatprep.subr.bf16.mxu0 0
    %672 = vmatpush1.bf16.msra.mxu0 %v652
    %673 = vmatprep.subr.bf16.mxu0 0
    %674 = vmatpush1.bf16.msra.mxu0 %v653
    %675 = vmatprep.subr.bf16.mxu0 0
    %676 = vmatpush1.bf16.msra.mxu0 %v654
    %677 = vmatprep.subr.bf16.mxu0 0
    %678 = vmatpush1.bf16.msra.mxu0 %v655
    %679 = vmatprep.subr.bf16.mxu0 0
    %680 = vmatpush1.bf16.msra.mxu0 %v656
    %681 = vmatprep.subr.bf16.mxu0 0
    %682 = vmatpush1.bf16.msra.mxu0 0
    %683 = vmatprep.subr.bf16.mxu0 0
    %684 = vmatpush1.bf16.msra.mxu0 0
    %685 = vmatprep.subr.bf16.mxu0 0
    %686 = vmatpush1.bf16.msra.mxu0 0
    %687 = vmatprep.subr.bf16.mxu0 0
    %688 = vmatpush1.bf16.msra.mxu0 0
    %689 = vmatprep.subr.bf16.mxu0 0
    %690 = vmatpush1.bf16.msra.mxu0 0
    %691 = vmatprep.subr.bf16.mxu0 0
    %692 = vmatpush1.bf16.msra.mxu0 0
    %693 = vmatprep.subr.bf16.mxu0 0
    %694 = vmatpush1.bf16.msra.mxu0 0
    %695 = vmatprep.subr.bf16.mxu0 0
    %696 = vmatpush1.bf16.msra.mxu0 0
    %697 = vmatprep.mubr.bf16.mxu0 0
    %698 = vmatmul.mubr.bf16.gmra.mrb[0].mxu0 %v610
    %v699 = vpop.f32.mrb[0].mxu0
    %v700 = vadd.f32 %v615, %v699
    %v701 = vpop.f32.mrb[0].mxu0
    %v702 = vpop.f32.mrb[0].mxu0
    %v703 = vadd.f32 %v615, %v702
    %v704 = vpop.f32.mrb[0].mxu0
    %705 = vdwg.mxu0
    %v706 = vmax.f32 %v700, 0.0
    %v707 = vmax.f32 %v703, 0.0
    %v708 = vld [vmem:[%s5] sm:$0xf]
    %v709 = vld [vmem:[%s5 + $0x4] sm:$0xf]
    %v710 = vld [vmem:[%s5 + $0x8] sm:$0xf]
    %v711 = vld [vmem:[%s5 + $0xc] sm:$0xf]
    %v712 = vld [vmem:[%s5 + $0x10] sm:$0xf]
    %v713 = vld [vmem:[%s5 + $0x14] sm:$0xf]
    %v714 = vld [vmem:[%s5 + $0x18] sm:$0xf]
    %v715 = vld [vmem:[%s5 + $0x1c] sm:$0xf]
    %v716 = vld [vmem:[%s5 + $0x20] sm:$0xf]
    %v717 = vld [vmem:[%s5 + $0x24] sm:$0xf]
    %v718 = vld [vmem:[%s5 + $0x28] sm:$0xf]
    %v719 = vld [vmem:[%s5 + $0x2c] sm:$0xf]
    %v720 = vld [vmem:[%s5 + $0x30] sm:$0xf]
    %v721 = vld [vmem:[%s5 + $0x34] sm:$0xf]
    %v722 = vld [vmem:[%s5 + $0x38] sm:$0xf]
    %v723 = vld [vmem:[%s5 + $0x3c] sm:$0xf]
    %v724 = vld [vmem:[%s6] sm:$0x1]
    %v725 = vpack.c.bf16 %v707, %v706
    %v727 = vlaneseq
    %v728 = vshrl.u32 %v727, 7
    %v729 = vsub.s32 0, %v728
    %v730 = vrot.slane %v724, %v729
    %v748 = vunpack.c.l.b16 %v708
    %v749 = vunpack.c.l.b16 %v709
    %v750 = vunpack.c.l.b16 %v710
    %v751 = vunpack.c.l.b16 %v711
    %v752 = vunpack.c.l.b16 %v712
    %v753 = vunpack.c.l.b16 %v713
    %v754 = vunpack.c.l.b16 %v714
    %v755 = vunpack.c.l.b16 %v715
    %v756 = vunpack.c.l.b16 %v716
    %v757 = vunpack.c.l.b16 %v717
    %v758 = vunpack.c.l.b16 %v718
    %v759 = vunpack.c.l.b16 %v719
    %v760 = vunpack.c.l.b16 %v720
    %v761 = vunpack.c.l.b16 %v721
    %v762 = vunpack.c.l.b16 %v722
    %v763 = vunpack.c.l.b16 %v723
    %v764 = vpack.c.b16 %v749, %v748
    %v765 = vpack.c.b16 %v751, %v750
    %v766 = vpack.c.b16 %v753, %v752
    %v767 = vpack.c.b16 %v755, %v754
    %v768 = vpack.c.b16 %v757, %v756
    %v769 = vpack.c.b16 %v759, %v758
    %v770 = vpack.c.b16 %v761, %v760
    %v771 = vpack.c.b16 %v763, %v762
    %780 = vmatprep.subr.bf16.mxu0 0
    %781 = vmatpush1.bf16.msra.mxu0 %v764
    %782 = vmatprep.subr.bf16.mxu0 0
    %783 = vmatpush1.bf16.msra.mxu0 %v765
    %784 = vmatprep.subr.bf16.mxu0 0
    %785 = vmatpush1.bf16.msra.mxu0 %v766
    %786 = vmatprep.subr.bf16.mxu0 0
    %787 = vmatpush1.bf16.msra.mxu0 %v767
    %788 = vmatprep.subr.bf16.mxu0 0
    %789 = vmatpush1.bf16.msra.mxu0 %v768
    %790 = vmatprep.subr.bf16.mxu0 0
    %791 = vmatpush1.bf16.msra.mxu0 %v769
    %792 = vmatprep.subr.bf16.mxu0 0
    %793 = vmatpush1.bf16.msra.mxu0 %v770
    %794 = vmatprep.subr.bf16.mxu0 0
    %795 = vmatpush1.bf16.msra.mxu0 %v771
    %796 = vmatprep.subr.bf16.mxu0 0
    %797 = vmatpush1.bf16.msra.mxu0 0
    %798 = vmatprep.subr.bf16.mxu0 0
    %799 = vmatpush1.bf16.msra.mxu0 0
    %800 = vmatprep.subr.bf16.mxu0 0
    %801 = vmatpush1.bf16.msra.mxu0 0
    %802 = vmatprep.subr.bf16.mxu0 0
    %803 = vmatpush1.bf16.msra.mxu0 0
    %804 = vmatprep.subr.bf16.mxu0 0
    %805 = vmatpush1.bf16.msra.mxu0 0
    %806 = vmatprep.subr.bf16.mxu0 0
    %807 = vmatpush1.bf16.msra.mxu0 0
    %808 = vmatprep.subr.bf16.mxu0 0
    %809 = vmatpush1.bf16.msra.mxu0 0
    %810 = vmatprep.subr.bf16.mxu0 0
    %811 = vmatpush1.bf16.msra.mxu0 0
    %812 = vmatprep.mubr.bf16.mxu0 0
    %813 = vmatmul.mubr.bf16.gmra.mrb[0].mxu0 %v725
    %v814 = vpop.f32.mrb[0].mxu0
    %v815 = vadd.f32 %v730, %v814
    %v816 = vpop.f32.mrb[0].mxu0
    %v817 = vpop.f32.mrb[0].mxu0
    %v818 = vadd.f32 %v730, %v817
    %v819 = vpop.f32.mrb[0].mxu0
    %820 = vdwg.mxu0
    %821 = vst [vmem:[#allocation2] sm:$0xff] %v815
    %822 = vst [vmem:[#allocation2 + $0x8] sm:$0xff] %v818
    // Predicated region
    $region30: #{_lambda_.5} parent=1 // pred_check
      _
    $region31: #{_lambda_.5} parent=1 // pred_check_branch
      %824 = sbr.rel (0) target = $region33
    $region32: #{_lambda_.5} parent=1 // pred_region
      %s826 = ssub.s32 256, 32
      %827 = vsyncadd [#allocation3], %s826
      %s828 = sshll.u32 [#allocation2], 4
      %s829 = int_to_ptr.vmem [resolvable:$true] %s828
      %834 = dma.vmem_to_hbm [thread:$0]  %s829, 32, %s7, [#allocation3], 32, 32, 2
    $region33: #{_lambda_.5} parent=1 // pred_fallthru
      _
    // Predicated region
    $region34: #{_lambda_.5} parent=1 // pred_check
      _
    $region35: #{_lambda_.5} parent=1 // pred_check_branch
      %836 = sbr.rel (0) target = $region37
    $region36: #{_lambda_.5} parent=1 // pred_region
      %837 = dma.done [#allocation3], 256
    $region37: #{_lambda_.5} parent=1 // pred_fallthru
      _
    %838 = vsyncpa [#allocation3], 1

</llo_original>
